<compile_context>
chip_gen: v6e
topology: v6e:2x2x1
jax: 0.10.0
libtpu: 0.0.40
codegen_flags: <defaults>
</compile_context>

<pallas_src>
import functools

import jax
import jax.numpy as jnp
from jax.experimental import pallas as pl
from jax.experimental.pallas import tpu as pltpu

FEATURE_UNITS = 117   # default feature_units
INPUT_UNITS = 128     # default input_units
HIDDEN = 32           # config GCN width
N_NODES = 8           # nodes per graph (small synthetic graphs)
BATCH = 16            # 16 graphs * 8 nodes = 128 rows -> fills the MXU M dim
LANE = 128            # TPU lane width


def _sequential_kernel(h0_ref, a_ref,
                       w_in_ref, b_in_ref,
                       w1_ref, b1_ref,
                       w2_ref, b2_ref,
                       out_ref):
    B, N, _ = a_ref.shape
    a = a_ref[...]                               # [B, N, N] normalized adjacency

    # f_in: Linear(117 -> 128) + Tanh, all B*N rows in one lane-dense MXU dot.
    h = jnp.tanh(
        jnp.dot(h0_ref[...], w_in_ref[...], preferred_element_type=jnp.float32)
        + b_in_ref[...])                         # [B*N, 128]

    # d0: GCN(128 -> 32, lane-padded to 128), a1: tanh
    hw = jnp.dot(h, w1_ref[...], preferred_element_type=jnp.float32)
    h3 = jnp.einsum('bpn,bnm->bpm', a, hw.reshape(B, N, LANE),
                    preferred_element_type=jnp.float32)
    h = jnp.tanh(h3 + b1_ref[...]).reshape(B * N, LANE)

    # d2: GCN(32 -> 32, lane-padded to 128), a3: tanh
    hw = jnp.dot(h, w2_ref[...], preferred_element_type=jnp.float32)
    h3 = jnp.einsum('bpn,bnm->bpm', a, hw.reshape(B, N, LANE),
                    preferred_element_type=jnp.float32)
    h3 = jnp.tanh(h3 + b2_ref[...])              # [B, N, 128]

    # dgl.sum_nodes(g, 'h'): per-graph sum over the node axis -> [B, 128]
    out_ref[...] = jnp.sum(h3, axis=1)


def _pad2(x, rows, cols):
    """Zero-pad a 2-D array up to (rows, cols)."""
    x = x.astype(jnp.float32)
    return jnp.zeros((rows, cols), jnp.float32).at[:x.shape[0], :x.shape[1]].set(x)


def pad_params(params):
    """Pad parameters to lane-dense shapes ONCE at init (not per forward call)."""
    w_in, b_in, w1, b1, w2, b2 = params
    f_pad = pl.cdiv(w_in.shape[0], LANE) * LANE          # 117 -> 128
    return (_pad2(w_in, f_pad, INPUT_UNITS),
            _pad2(b_in, 1, INPUT_UNITS),
            _pad2(w1, INPUT_UNITS, LANE),
            _pad2(b1, 1, LANE),
            _pad2(w2, LANE, LANE),
            _pad2(b2, 1, LANE))


@functools.partial(jax.jit, static_argnames=('d_out',))
def sequential_forward(h0, a_norm, padded_params, d_out=HIDDEN):
    """h0: [B, N, F] node features; a_norm: [B, N, N] normalized adjacency.

    padded_params: output of pad_params() (computed once at init).
    """
    B, N, F = h0.shape
    f_pad = pl.cdiv(F, LANE) * LANE

    # Flatten graphs and zero-pad the feature lane axis (fuses under jit).
    h0_flat = jnp.zeros((B * N, f_pad), jnp.float32).at[:, :F].set(
        h0.reshape(B * N, F).astype(jnp.float32))
    a = a_norm.astype(jnp.float32)

    vmem = pl.BlockSpec(memory_space=pltpu.MemorySpace.VMEM)
    out = pl.pallas_call(
        _sequential_kernel,
        out_shape=jax.ShapeDtypeStruct((B, LANE), jnp.float32),
        in_specs=[vmem] * 8,
        out_specs=vmem,
    )(h0_flat, a, *padded_params)

    return out[:, :d_out]


def _init_linear(key, fan_in, fan_out):
    # PyTorch nn.Linear default init: U(-1/sqrt(fan_in), 1/sqrt(fan_in))
    k_w, k_b = jax.random.split(key)
    bound = 1.0 / jnp.sqrt(fan_in)
    w = jax.random.uniform(k_w, (fan_in, fan_out), jnp.float32, -bound, bound)
    b = jax.random.uniform(k_b, (1, fan_out), jnp.float32, -bound, bound)
    return w, b


def _make_graph(key, n):
    # Random symmetric adjacency with self-loops, GCN normalization
    # A_hat = D^{-1/2} (A + I) D^{-1/2}
    a = (jax.random.uniform(key, (n, n)) > 0.5).astype(jnp.float32)
    a = jnp.maximum(a, a.T)
    a = a + jnp.eye(n, dtype=jnp.float32)
    deg = jnp.sum(a, axis=1)
    d_inv_sqrt = 1.0 / jnp.sqrt(deg)
    return a * d_inv_sqrt[:, None] * d_inv_sqrt[None, :]


def _reference(h0, a_norm, params):
    (w_in, b_in, w1, b1, w2, b2) = params
    hp = jax.lax.Precision.HIGHEST
    h = jnp.tanh(jnp.einsum('bnf,fk->bnk', h0, w_in, precision=hp) + b_in)
    h = jnp.einsum('bnk,km->bnm', h, w1, precision=hp)
    h = jnp.tanh(jnp.einsum('bpn,bnm->bpm', a_norm, h, precision=hp) + b1)
    h = jnp.einsum('bnk,km->bnm', h, w2, precision=hp)
    h = jnp.tanh(jnp.einsum('bpn,bnm->bpm', a_norm, h, precision=hp) + b2)
    return jnp.sum(h, axis=1)


if __name__ == "__main__":
    key = jax.random.PRNGKey(0)
    k_h, k_graphs, k_in, k_1, k_2 = jax.random.split(key, 5)

    # Node features h0: [B, N, 117]
    h0 = jax.random.normal(k_h, (BATCH, N_NODES, FEATURE_UNITS), jnp.float32)
    # Per-graph normalized adjacency: [B, N, N]
    graph_keys = jax.random.split(k_graphs, BATCH)
    a_norm = jnp.stack([_make_graph(gk, N_NODES) for gk in graph_keys])

    # Deterministic parameters (shapes from __init__):
    #   f_in  : Linear(117, 128)
    #   d0    : GCN(128, 32)
    #   d2    : GCN(32, 32)
    w_in, b_in = _init_linear(k_in, FEATURE_UNITS, INPUT_UNITS)
    w1, b1 = _init_linear(k_1, INPUT_UNITS, HIDDEN)
    w2, b2 = _init_linear(k_2, HIDDEN, HIDDEN)
    params = (w_in, b_in, w1, b1, w2, b2)

    # Pad parameters once at init (outside the per-call path).
    padded_params = jax.block_until_ready(pad_params(params))

    out = sequential_forward(h0, a_norm, padded_params)
    out = jax.block_until_ready(out)

    ref = _reference(h0, a_norm, params)
    assert out.shape == (BATCH, HIDDEN)
    assert jnp.allclose(out, ref, atol=1e-4, rtol=1e-4), \
        float(jnp.max(jnp.abs(out - ref)))

    print("KERNEL_OK")
</pallas_src>

<mosaic_0001>
module attributes {stable_mosaic.version = 11 : i64} {
  func.func @_sequential_kernel(%arg0: memref<128x128xf32, #tpu.memory_space<vmem>>, %arg1: memref<16x8x8xf32, #tpu.memory_space<vmem>>, %arg2: memref<128x128xf32, #tpu.memory_space<vmem>>, %arg3: memref<1x128xf32, #tpu.memory_space<vmem>>, %arg4: memref<128x128xf32, #tpu.memory_space<vmem>>, %arg5: memref<1x128xf32, #tpu.memory_space<vmem>>, %arg6: memref<128x128xf32, #tpu.memory_space<vmem>>, %arg7: memref<1x128xf32, #tpu.memory_space<vmem>>, %arg8: memref<16x128xf32, #tpu.memory_space<vmem>>) attributes {dimension_semantics = [], scalar_prefetch = 0 : i64, scratch_operands = 0 : i64, tpu.core_type = #tpu.core_type<tc>} {
    %c0 = arith.constant 0 : index
    %c0_0 = arith.constant 0 : index
    %c0_1 = arith.constant 0 : index
    %0 = vector.load %arg1[%c0, %c0_0, %c0_1] : memref<16x8x8xf32, #tpu.memory_space<vmem>>, vector<16x8x8xf32>
    %c0_2 = arith.constant 0 : index
    %c0_3 = arith.constant 0 : index
    %1 = vector.load %arg0[%c0_2, %c0_3] : memref<128x128xf32, #tpu.memory_space<vmem>>, vector<128x128xf32>
    %c0_4 = arith.constant 0 : index
    %c0_5 = arith.constant 0 : index
    %2 = vector.load %arg2[%c0_4, %c0_5] : memref<128x128xf32, #tpu.memory_space<vmem>>, vector<128x128xf32>
    %cst = arith.constant dense<0.000000e+00> : vector<128x128xf32>
    %3 = tpu.matmul %1, %2, %cst {dimension_numbers = #tpu.dot_dimension_numbers<[1], [0], [0], [1], [0, 0, 1, 1], [], []>} : vector<128x128xf32>, vector<128x128xf32>, vector<128x128xf32> -> vector<128x128xf32>
    %c0_6 = arith.constant 0 : index
    %c0_7 = arith.constant 0 : index
    %4 = vector.load %arg3[%c0_6, %c0_7] : memref<1x128xf32, #tpu.memory_space<vmem>>, vector<1x128xf32>
    %5 = vector.broadcast %4 : vector<1x128xf32> to vector<128x128xf32>
    %6 = arith.addf %3, %5 : vector<128x128xf32>
    %7 = math.tanh %6 : vector<128x128xf32>
    %c0_8 = arith.constant 0 : index
    %c0_9 = arith.constant 0 : index
    %8 = vector.load %arg4[%c0_8, %c0_9] : memref<128x128xf32, #tpu.memory_space<vmem>>, vector<128x128xf32>
    %cst_10 = arith.constant dense<0.000000e+00> : vector<128x128xf32>
    %9 = tpu.matmul %7, %8, %cst_10 {dimension_numbers = #tpu.dot_dimension_numbers<[1], [0], [0], [1], [0, 0, 1, 1], [], []>} : vector<128x128xf32>, vector<128x128xf32>, vector<128x128xf32> -> vector<128x128xf32>
    %10 = vector.shape_cast %9 : vector<128x128xf32> to vector<16x8x128xf32>
    "tpu.trace_start"() <{level = 10 : i32, message = "bpn,bnm->bpm"}> : () -> ()
    %cst_11 = arith.constant dense<0.000000e+00> : vector<16x8x128xf32>
    %11 = tpu.matmul %0, %10, %cst_11 {dimension_numbers = #tpu.dot_dimension_numbers<[2], [1], [1], [2], [0, 0, 0, 1, 1, 2], [0], [0]>} : vector<16x8x8xf32>, vector<16x8x128xf32>, vector<16x8x128xf32> -> vector<16x8x128xf32>
    "tpu.trace_stop"() : () -> ()
    %c0_12 = arith.constant 0 : index
    %c0_13 = arith.constant 0 : index
    %12 = vector.load %arg5[%c0_12, %c0_13] : memref<1x128xf32, #tpu.memory_space<vmem>>, vector<1x128xf32>
    %13 = vector.shape_cast %12 : vector<1x128xf32> to vector<1x1x128xf32>
    %14 = vector.broadcast %13 : vector<1x1x128xf32> to vector<16x8x128xf32>
    %15 = arith.addf %11, %14 : vector<16x8x128xf32>
    %16 = math.tanh %15 : vector<16x8x128xf32>
    %17 = vector.shape_cast %16 : vector<16x8x128xf32> to vector<128x128xf32>
    %c0_14 = arith.constant 0 : index
    %c0_15 = arith.constant 0 : index
    %18 = vector.load %arg6[%c0_14, %c0_15] : memref<128x128xf32, #tpu.memory_space<vmem>>, vector<128x128xf32>
    %cst_16 = arith.constant dense<0.000000e+00> : vector<128x128xf32>
    %19 = tpu.matmul %17, %18, %cst_16 {dimension_numbers = #tpu.dot_dimension_numbers<[1], [0], [0], [1], [0, 0, 1, 1], [], []>} : vector<128x128xf32>, vector<128x128xf32>, vector<128x128xf32> -> vector<128x128xf32>
    %20 = vector.shape_cast %19 : vector<128x128xf32> to vector<16x8x128xf32>
    "tpu.trace_start"() <{level = 10 : i32, message = "bpn,bnm->bpm"}> : () -> ()
    %cst_17 = arith.constant dense<0.000000e+00> : vector<16x8x128xf32>
    %21 = tpu.matmul %0, %20, %cst_17 {dimension_numbers = #tpu.dot_dimension_numbers<[2], [1], [1], [2], [0, 0, 0, 1, 1, 2], [0], [0]>} : vector<16x8x8xf32>, vector<16x8x128xf32>, vector<16x8x128xf32> -> vector<16x8x128xf32>
    "tpu.trace_stop"() : () -> ()
    %c0_18 = arith.constant 0 : index
    %c0_19 = arith.constant 0 : index
    %22 = vector.load %arg7[%c0_18, %c0_19] : memref<1x128xf32, #tpu.memory_space<vmem>>, vector<1x128xf32>
    %23 = vector.shape_cast %22 : vector<1x128xf32> to vector<1x1x128xf32>
    %24 = vector.broadcast %23 : vector<1x1x128xf32> to vector<16x8x128xf32>
    %25 = arith.addf %21, %24 : vector<16x8x128xf32>
    %26 = math.tanh %25 : vector<16x8x128xf32>
    %cst_20 = arith.constant dense<0.000000e+00> : vector<16x128xf32>
    %27 = vector.multi_reduction <add>, %26, %cst_20 [1] : vector<16x8x128xf32> to vector<16x128xf32>
    %c0_21 = arith.constant 0 : index
    %c0_22 = arith.constant 0 : index
    %28 = vector.load %arg8[%c0_21, %c0_22] : memref<16x128xf32, #tpu.memory_space<vmem>>, vector<16x128xf32>
    tpu.vector_store %arg8[%c0_21, %c0_22], %27 {strides = array<i32>} : memref<16x128xf32, #tpu.memory_space<vmem>>, vector<16x128xf32>,
    return
  }
}

</mosaic_0001>

<llo_original>
// kernel: sequential_forward.1
$region0: #{sequential_forward.1}
  #allocation0 [shape = 'u32[]', space=smem, size = 0x4, offset = 0x4, fixed_abs, tag = 'smem constant byte address 0x4 - core index']
  #allocation1 [shape = 'u32[144,128]{1,0:T(1,128)}', space=vmem, size = 0x12000, scoped, tag = 'internal scratch']
  %s0 = inlined_call_operand.vmem [shape: f32[128,128], index: 0, kind: input, shape index: {}]
  %s1 = inlined_call_operand.vmem [shape: f32[16,8,8], index: 1, kind: input, shape index: {}]
  %s2 = inlined_call_operand.vmem [shape: f32[128,128], index: 2, kind: input, shape index: {}]
  %s3 = inlined_call_operand.vmem [shape: f32[1,128], index: 3, kind: input, shape index: {}]
  %s4 = inlined_call_operand.vmem [shape: f32[128,128], index: 4, kind: input, shape index: {}]
  %s5 = inlined_call_operand.vmem [shape: f32[1,128], index: 5, kind: input, shape index: {}]
  %s6 = inlined_call_operand.vmem [shape: f32[128,128], index: 6, kind: input, shape index: {}]
  %s7 = inlined_call_operand.vmem [shape: f32[1,128], index: 7, kind: input, shape index: {}]
  %s8 = inlined_call_operand.hbm [shape: f32[16,128], index: 8, kind: output, shape index: {}]
  %s9 = sld [smem:[#allocation0]]
  $region42: #{sequential_forward.1} parent=0
    _
  %s11 = ssub.s32 1, %s9
  %s12 = scalar_select 0, %s11, %s9
  $region1: #{sequential_forward.1} parent=0
    #allocation2 [shape = 'u8[8192]{0}', space=vmem, size = 0x2000, scoped, tag = 'output window, operand 0, single buffered']
    #allocation3 [shape = 's32[1]{0}', space=sflag, size = 0x4, scoped, tag = 'scoped memory for sequential_forward.1']
    %13 = vsyncpa [#allocation3], 0
    // Predicated region
    $region2: #{sequential_forward.1} parent=1 // pred_check
      _
    $region3: #{sequential_forward.1} parent=1 // pred_check_branch
      %15 = sbr.rel (0) target = $region5
    $region4: #{sequential_forward.1} parent=1 // pred_region
      _
    $region5: #{sequential_forward.1} parent=1 // pred_fallthru
      _
    // Predicated region
    $region6: #{sequential_forward.1} parent=1 // pred_check
      _
    $region7: #{sequential_forward.1} parent=1 // pred_check_branch
      %17 = sbr.rel (0) target = $region9
    $region8: #{sequential_forward.1} parent=1 // pred_region
      _
    $region9: #{sequential_forward.1} parent=1 // pred_fallthru
      _
    // Predicated region
    $region10: #{sequential_forward.1} parent=1 // pred_check
      _
    $region11: #{sequential_forward.1} parent=1 // pred_check_branch
      %19 = sbr.rel (0) target = $region13
    $region12: #{sequential_forward.1} parent=1 // pred_region
      _
    $region13: #{sequential_forward.1} parent=1 // pred_fallthru
      _
    // Predicated region
    $region14: #{sequential_forward.1} parent=1 // pred_check
      _
    $region15: #{sequential_forward.1} parent=1 // pred_check_branch
      %21 = sbr.rel (0) target = $region17
    $region16: #{sequential_forward.1} parent=1 // pred_region
      _
    $region17: #{sequential_forward.1} parent=1 // pred_fallthru
      _
    // Predicated region
    $region18: #{sequential_forward.1} parent=1 // pred_check
      _
    $region19: #{sequential_forward.1} parent=1 // pred_check_branch
      %23 = sbr.rel (0) target = $region21
    $region20: #{sequential_forward.1} parent=1 // pred_region
      _
    $region21: #{sequential_forward.1} parent=1 // pred_fallthru
      _
    // Predicated region
    $region22: #{sequential_forward.1} parent=1 // pred_check
      _
    $region23: #{sequential_forward.1} parent=1 // pred_check_branch
      %25 = sbr.rel (0) target = $region25
    $region24: #{sequential_forward.1} parent=1 // pred_region
      _
    $region25: #{sequential_forward.1} parent=1 // pred_fallthru
      _
    // Predicated region
    $region26: #{sequential_forward.1} parent=1 // pred_check
      _
    $region27: #{sequential_forward.1} parent=1 // pred_check_branch
      %27 = sbr.rel (0) target = $region29
    $region28: #{sequential_forward.1} parent=1 // pred_region
      _
    $region29: #{sequential_forward.1} parent=1 // pred_fallthru
      _
    // Predicated region
    $region30: #{sequential_forward.1} parent=1 // pred_check
      _
    $region31: #{sequential_forward.1} parent=1 // pred_check_branch
      %29 = sbr.rel (0) target = $region33
    $region32: #{sequential_forward.1} parent=1 // pred_region
      _
    $region33: #{sequential_forward.1} parent=1 // pred_fallthru
      _
    %v30 = vld [vmem:[%s1] sm:$0xff]
    %v31 = vld [vmem:[%s1 + $0x8] sm:$0xff]
    %v32 = vld [vmem:[%s1 + $0x10] sm:$0xff]
    %v33 = vld [vmem:[%s1 + $0x18] sm:$0xff]
    %v34 = vld [vmem:[%s1 + $0x20] sm:$0xff]
    %v35 = vld [vmem:[%s1 + $0x28] sm:$0xff]
    %v36 = vld [vmem:[%s1 + $0x30] sm:$0xff]
    %v37 = vld [vmem:[%s1 + $0x38] sm:$0xff]
    %v38 = vld [vmem:[%s1 + $0x40] sm:$0xff]
    %v39 = vld [vmem:[%s1 + $0x48] sm:$0xff]
    %v40 = vld [vmem:[%s1 + $0x50] sm:$0xff]
    %v41 = vld [vmem:[%s1 + $0x58] sm:$0xff]
    %v42 = vld [vmem:[%s1 + $0x60] sm:$0xff]
    %v43 = vld [vmem:[%s1 + $0x68] sm:$0xff]
    %v44 = vld [vmem:[%s1 + $0x70] sm:$0xff]
    %v45 = vld [vmem:[%s1 + $0x78] sm:$0xff]
    %v46 = vld [vmem:[%s0] sm:$0xff]
    %v47 = vld [vmem:[%s0 + $0x8] sm:$0xff]
    %v48 = vld [vmem:[%s0 + $0x10] sm:$0xff]
    %v49 = vld [vmem:[%s0 + $0x18] sm:$0xff]
    %v50 = vld [vmem:[%s0 + $0x20] sm:$0xff]
    %v51 = vld [vmem:[%s0 + $0x28] sm:$0xff]
    %v52 = vld [vmem:[%s0 + $0x30] sm:$0xff]
    %v53 = vld [vmem:[%s0 + $0x38] sm:$0xff]
    %v54 = vld [vmem:[%s0 + $0x40] sm:$0xff]
    %v55 = vld [vmem:[%s0 + $0x48] sm:$0xff]
    %v56 = vld [vmem:[%s0 + $0x50] sm:$0xff]
    %v57 = vld [vmem:[%s0 + $0x58] sm:$0xff]
    %v58 = vld [vmem:[%s0 + $0x60] sm:$0xff]
    %v59 = vld [vmem:[%s0 + $0x68] sm:$0xff]
    %v60 = vld [vmem:[%s0 + $0x70] sm:$0xff]
    %v61 = vld [vmem:[%s0 + $0x78] sm:$0xff]
    %v62 = vld [vmem:[%s2] sm:$0xff]
    %v63 = vld [vmem:[%s2 + $0x8] sm:$0xff]
    %v64 = vld [vmem:[%s2 + $0x10] sm:$0xff]
    %v65 = vld [vmem:[%s2 + $0x18] sm:$0xff]
    %v66 = vld [vmem:[%s2 + $0x20] sm:$0xff]
    %v67 = vld [vmem:[%s2 + $0x28] sm:$0xff]
    %v68 = vld [vmem:[%s2 + $0x30] sm:$0xff]
    %v69 = vld [vmem:[%s2 + $0x38] sm:$0xff]
    %v70 = vld [vmem:[%s2 + $0x40] sm:$0xff]
    %v71 = vld [vmem:[%s2 + $0x48] sm:$0xff]
    %v72 = vld [vmem:[%s2 + $0x50] sm:$0xff]
    %v73 = vld [vmem:[%s2 + $0x58] sm:$0xff]
    %v74 = vld [vmem:[%s2 + $0x60] sm:$0xff]
    %v75 = vld [vmem:[%s2 + $0x68] sm:$0xff]
    %v76 = vld [vmem:[%s2 + $0x70] sm:$0xff]
    %v77 = vld [vmem:[%s2 + $0x78] sm:$0xff]
    %v78 = vld [vmem:[%s3] sm:$0x1]
    %v80 = vlaneseq
    %v81 = vshrl.u32 %v80, 7
    %v82 = vsub.s32 0, %v81
    %v83 = vrot.slane %v78, %v82
    %85 = vmatprep.subr.mxu0 0.0
    %86 = vmatpush1.msra.mxu0 %v77
    %87 = vmatprep.subr.mxu0 0.0
    %88 = vmatpush1.msra.mxu0 %v76
    %89 = vmatprep.subr.mxu0 0.0
    %90 = vmatpush1.msra.mxu0 %v75
    %91 = vmatprep.subr.mxu0 0.0
    %92 = vmatpush1.msra.mxu0 %v74
    %93 = vmatprep.subr.mxu0 0.0
    %94 = vmatpush1.msra.mxu0 %v73
    %95 = vmatprep.subr.mxu0 0.0
    %96 = vmatpush1.msra.mxu0 %v72
    %97 = vmatprep.subr.mxu0 0.0
    %98 = vmatpush1.msra.mxu0 %v71
    %99 = vmatprep.subr.mxu0 0.0
    %100 = vmatpush1.msra.mxu0 %v70
    %101 = vmatprep.subr.mxu0 0.0
    %102 = vmatpush1.msra.mxu0 %v69
    %103 = vmatprep.subr.mxu0 0.0
    %104 = vmatpush1.msra.mxu0 %v68
    %105 = vmatprep.subr.mxu0 0.0
    %106 = vmatpush1.msra.mxu0 %v67
    %107 = vmatprep.subr.mxu0 0.0
    %108 = vmatpush1.msra.mxu0 %v66
    %109 = vmatprep.subr.mxu0 0.0
    %110 = vmatpush1.msra.mxu0 %v65
    %111 = vmatprep.subr.mxu0 0.0
    %112 = vmatpush1.msra.mxu0 %v64
    %113 = vmatprep.subr.mxu0 0.0
    %114 = vmatpush1.msra.mxu0 %v63
    %115 = vmatprep.subr.mxu0 0.0
    %116 = vmatpush1.msra.mxu0 %v62
    %117 = vmatprep.subr.mxu0 0.0
    %118 = vmatpush2.msra.mxu0 0.0
    %119 = vmatprep.subr.mxu0 0.0
    %120 = vmatpush2.msra.mxu0 0.0
    %121 = vmatprep.subr.mxu0 0.0
    %122 = vmatpush2.msra.mxu0 0.0
    %123 = vmatprep.subr.mxu0 0.0
    %124 = vmatpush2.msra.mxu0 0.0
    %125 = vmatprep.subr.mxu0 0.0
    %126 = vmatpush2.msra.mxu0 0.0
    %127 = vmatprep.subr.mxu0 0.0
    %128 = vmatpush2.msra.mxu0 0.0
    %129 = vmatprep.subr.mxu0 0.0
    %130 = vmatpush2.msra.mxu0 0.0
    %131 = vmatprep.subr.mxu0 0.0
    %132 = vmatpush2.msra.mxu0 0.0
    %133 = vmatprep.subr.mxu0 0.0
    %134 = vmatpush2.msra.mxu0 0.0
    %135 = vmatprep.subr.mxu0 0.0
    %136 = vmatpush2.msra.mxu0 0.0
    %137 = vmatprep.subr.mxu0 0.0
    %138 = vmatpush2.msra.mxu0 0.0
    %139 = vmatprep.subr.mxu0 0.0
    %140 = vmatpush2.msra.mxu0 0.0
    %141 = vmatprep.subr.mxu0 0.0
    %142 = vmatpush2.msra.mxu0 0.0
    %143 = vmatprep.subr.mxu0 0.0
    %144 = vmatpush2.msra.mxu0 0.0
    %145 = vmatprep.subr.mxu0 0.0
    %146 = vmatpush2.msra.mxu0 0.0
    %147 = vmatprep.subr.mxu0 0.0
    %148 = vmatpush2.msra.mxu0 0.0
    %149 = vmatprep.mubr.f32.mxu0 0.0
    %150 = vmatmul.mubr.f32.gmra.mxu0 %v46
    %v151 = vpop.f32.mrf.mxu0
    %v152 = vadd.f32 %v83, %v151
    %v153 = vpop.f32.mrf.mxu0
    %154 = vmatprep.mubr.f32.mxu0 0.0
    %155 = vmatmul.mubr.f32.gmra.mxu0 %v47
    %v156 = vpop.f32.mrf.mxu0
    %v157 = vadd.f32 %v83, %v156
    %v158 = vpop.f32.mrf.mxu0
    %159 = vmatprep.mubr.f32.mxu0 0.0
    %160 = vmatmul.mubr.f32.gmra.mxu0 %v48
    %v161 = vpop.f32.mrf.mxu0
    %v162 = vadd.f32 %v83, %v161
    %v163 = vpop.f32.mrf.mxu0
    %164 = vmatprep.mubr.f32.mxu0 0.0
    %165 = vmatmul.mubr.f32.gmra.mxu0 %v49
    %v166 = vpop.f32.mrf.mxu0
    %v167 = vadd.f32 %v83, %v166
    %v168 = vpop.f32.mrf.mxu0
    %169 = vmatprep.mubr.f32.mxu0 0.0
    %170 = vmatmul.mubr.f32.gmra.mxu0 %v50
    %v171 = vpop.f32.mrf.mxu0
    %v172 = vadd.f32 %v83, %v171
    %v173 = vpop.f32.mrf.mxu0
    %174 = vmatprep.mubr.f32.mxu0 0.0
    %175 = vmatmul.mubr.f32.gmra.mxu0 %v51
    %v176 = vpop.f32.mrf.mxu0
    %v177 = vadd.f32 %v83, %v176
    %v178 = vpop.f32.mrf.mxu0
    %179 = vmatprep.mubr.f32.mxu0 0.0
    %180 = vmatmul.mubr.f32.gmra.mxu0 %v52
    %v181 = vpop.f32.mrf.mxu0
    %v182 = vadd.f32 %v83, %v181
    %v183 = vpop.f32.mrf.mxu0
    %184 = vmatprep.mubr.f32.mxu0 0.0
    %185 = vmatmul.mubr.f32.gmra.mxu0 %v53
    %v186 = vpop.f32.mrf.mxu0
    %v187 = vadd.f32 %v83, %v186
    %v188 = vpop.f32.mrf.mxu0
    %189 = vmatprep.mubr.f32.mxu0 0.0
    %190 = vmatmul.mubr.f32.gmra.mxu0 %v54
    %v191 = vpop.f32.mrf.mxu0
    %v192 = vadd.f32 %v83, %v191
    %v193 = vpop.f32.mrf.mxu0
    %194 = vmatprep.mubr.f32.mxu0 0.0
    %195 = vmatmul.mubr.f32.gmra.mxu0 %v55
    %v196 = vpop.f32.mrf.mxu0
    %v197 = vadd.f32 %v83, %v196
    %v198 = vpop.f32.mrf.mxu0
    %199 = vmatprep.mubr.f32.mxu0 0.0
    %200 = vmatmul.mubr.f32.gmra.mxu0 %v56
    %v201 = vpop.f32.mrf.mxu0
    %v202 = vadd.f32 %v83, %v201
    %v203 = vpop.f32.mrf.mxu0
    %204 = vmatprep.mubr.f32.mxu0 0.0
    %205 = vmatmul.mubr.f32.gmra.mxu0 %v57
    %v206 = vpop.f32.mrf.mxu0
    %v207 = vadd.f32 %v83, %v206
    %v208 = vpop.f32.mrf.mxu0
    %209 = vmatprep.mubr.f32.mxu0 0.0
    %210 = vmatmul.mubr.f32.gmra.mxu0 %v58
    %v211 = vpop.f32.mrf.mxu0
    %v212 = vadd.f32 %v83, %v211
    %v213 = vpop.f32.mrf.mxu0
    %214 = vmatprep.mubr.f32.mxu0 0.0
    %215 = vmatmul.mubr.f32.gmra.mxu0 %v59
    %v216 = vpop.f32.mrf.mxu0
    %v217 = vadd.f32 %v83, %v216
    %v218 = vpop.f32.mrf.mxu0
    %219 = vmatprep.mubr.f32.mxu0 0.0
    %220 = vmatmul.mubr.f32.gmra.mxu0 %v60
    %v221 = vpop.f32.mrf.mxu0
    %v222 = vadd.f32 %v83, %v221
    %v223 = vpop.f32.mrf.mxu0
    %224 = vmatprep.mubr.f32.mxu0 0.0
    %225 = vmatmul.mubr.f32.gmra.mxu0 %v61
    %v226 = vpop.f32.mrf.mxu0
    %v227 = vadd.f32 %v83, %v226
    %v228 = vpop.f32.mrf.mxu0
    %229 = vdwg.mxu0
    %v230 = vtanh.pop %v152
    %v231 = vtanh.pop %v157
    %v232 = vtanh.pop %v162
    %v233 = vtanh.pop %v167
    %v234 = vtanh.pop %v172
    %v235 = vtanh.pop %v177
    %v236 = vtanh.pop %v182
    %v237 = vtanh.pop %v187
    %v238 = vtanh.pop %v192
    %v239 = vtanh.pop %v197
    %v240 = vtanh.pop %v202
    %v241 = vtanh.pop %v207
    %v242 = vtanh.pop %v212
    %v243 = vtanh.pop %v217
    %v244 = vtanh.pop %v222
    %v245 = vtanh.pop %v227
    %v246 = vld [vmem:[%s4] sm:$0xff]
    %v247 = vld [vmem:[%s4 + $0x8] sm:$0xff]
    %v248 = vld [vmem:[%s4 + $0x10] sm:$0xff]
    %v249 = vld [vmem:[%s4 + $0x18] sm:$0xff]
    %v250 = vld [vmem:[%s4 + $0x20] sm:$0xff]
    %v251 = vld [vmem:[%s4 + $0x28] sm:$0xff]
    %v252 = vld [vmem:[%s4 + $0x30] sm:$0xff]
    %v253 = vld [vmem:[%s4 + $0x38] sm:$0xff]
    %v254 = vld [vmem:[%s4 + $0x40] sm:$0xff]
    %v255 = vld [vmem:[%s4 + $0x48] sm:$0xff]
    %v256 = vld [vmem:[%s4 + $0x50] sm:$0xff]
    %v257 = vld [vmem:[%s4 + $0x58] sm:$0xff]
    %v258 = vld [vmem:[%s4 + $0x60] sm:$0xff]
    %v259 = vld [vmem:[%s4 + $0x68] sm:$0xff]
    %v260 = vld [vmem:[%s4 + $0x70] sm:$0xff]
    %v261 = vld [vmem:[%s4 + $0x78] sm:$0xff]
    %262 = vmatprep.subr.mxu0 0.0
    %263 = vmatpush1.msra.mxu0 %v261
    %264 = vmatprep.subr.mxu0 0.0
    %265 = vmatpush1.msra.mxu0 %v260
    %266 = vmatprep.subr.mxu0 0.0
    %267 = vmatpush1.msra.mxu0 %v259
    %268 = vmatprep.subr.mxu0 0.0
    %269 = vmatpush1.msra.mxu0 %v258
    %270 = vmatprep.subr.mxu0 0.0
    %271 = vmatpush1.msra.mxu0 %v257
    %272 = vmatprep.subr.mxu0 0.0
    %273 = vmatpush1.msra.mxu0 %v256
    %274 = vmatprep.subr.mxu0 0.0
    %275 = vmatpush1.msra.mxu0 %v255
    %276 = vmatprep.subr.mxu0 0.0
    %277 = vmatpush1.msra.mxu0 %v254
    %278 = vmatprep.subr.mxu0 0.0
    %279 = vmatpush1.msra.mxu0 %v253
    %280 = vmatprep.subr.mxu0 0.0
    %281 = vmatpush1.msra.mxu0 %v252
    %282 = vmatprep.subr.mxu0 0.0
    %283 = vmatpush1.msra.mxu0 %v251
    %284 = vmatprep.subr.mxu0 0.0
    %285 = vmatpush1.msra.mxu0 %v250
    %286 = vmatprep.subr.mxu0 0.0
    %287 = vmatpush1.msra.mxu0 %v249
    %288 = vmatprep.subr.mxu0 0.0
    %289 = vmatpush1.msra.mxu0 %v248
    %290 = vmatprep.subr.mxu0 0.0
    %291 = vmatpush1.msra.mxu0 %v247
    %292 = vmatprep.subr.mxu0 0.0
    %293 = vmatpush1.msra.mxu0 %v246
    %294 = vmatprep.subr.mxu0 0.0
    %295 = vmatpush2.msra.mxu0 0.0
    %296 = vmatprep.subr.mxu0 0.0
    %297 = vmatpush2.msra.mxu0 0.0
    %298 = vmatprep.subr.mxu0 0.0
    %299 = vmatpush2.msra.mxu0 0.0
    %300 = vmatprep.subr.mxu0 0.0
    %301 = vmatpush2.msra.mxu0 0.0
    %302 = vmatprep.subr.mxu0 0.0
    %303 = vmatpush2.msra.mxu0 0.0
    %304 = vmatprep.subr.mxu0 0.0
    %305 = vmatpush2.msra.mxu0 0.0
    %306 = vmatprep.subr.mxu0 0.0
    %307 = vmatpush2.msra.mxu0 0.0
    %308 = vmatprep.subr.mxu0 0.0
    %309 = vmatpush2.msra.mxu0 0.0
    %310 = vmatprep.subr.mxu0 0.0
    %311 = vmatpush2.msra.mxu0 0.0
    %312 = vmatprep.subr.mxu0 0.0
    %313 = vmatpush2.msra.mxu0 0.0
    %314 = vmatprep.subr.mxu0 0.0
    %315 = vmatpush2.msra.mxu0 0.0
    %316 = vmatprep.subr.mxu0 0.0
    %317 = vmatpush2.msra.mxu0 0.0
    %318 = vmatprep.subr.mxu0 0.0
    %319 = vmatpush2.msra.mxu0 0.0
    %320 = vmatprep.subr.mxu0 0.0
    %321 = vmatpush2.msra.mxu0 0.0
    %322 = vmatprep.subr.mxu0 0.0
    %323 = vmatpush2.msra.mxu0 0.0
    %324 = vmatprep.subr.mxu0 0.0
    %325 = vmatpush2.msra.mxu0 0.0
    %326 = vmatprep.mubr.f32.mxu0 0.0
    %327 = vmatmul.mubr.f32.gmra.mxu0 %v230
    %v328 = vpop.f32.mrf.mxu0
    %v329 = vadd.f32 0.0, %v328
    %v330 = vpop.f32.mrf.mxu0
    %331 = vmatprep.mubr.f32.mxu0 0.0
    %332 = vmatmul.mubr.f32.gmra.mxu0 %v231
    %v333 = vpop.f32.mrf.mxu0
    %v334 = vadd.f32 0.0, %v333
    %v335 = vpop.f32.mrf.mxu0
    %336 = vmatprep.mubr.f32.mxu0 0.0
    %337 = vmatmul.mubr.f32.gmra.mxu0 %v232
    %v338 = vpop.f32.mrf.mxu0
    %v339 = vadd.f32 0.0, %v338
    %v340 = vpop.f32.mrf.mxu0
    %341 = vmatprep.mubr.f32.mxu0 0.0
    %342 = vmatmul.mubr.f32.gmra.mxu0 %v233
    %v343 = vpop.f32.mrf.mxu0
    %v344 = vadd.f32 0.0, %v343
    %v345 = vpop.f32.mrf.mxu0
    %346 = vmatprep.mubr.f32.mxu0 0.0
    %347 = vmatmul.mubr.f32.gmra.mxu0 %v234
    %v348 = vpop.f32.mrf.mxu0
    %v349 = vadd.f32 0.0, %v348
    %v350 = vpop.f32.mrf.mxu0
    %351 = vmatprep.mubr.f32.mxu0 0.0
    %352 = vmatmul.mubr.f32.gmra.mxu0 %v235
    %v353 = vpop.f32.mrf.mxu0
    %v354 = vadd.f32 0.0, %v353
    %v355 = vpop.f32.mrf.mxu0
    %356 = vmatprep.mubr.f32.mxu0 0.0
    %357 = vmatmul.mubr.f32.gmra.mxu0 %v236
    %v358 = vpop.f32.mrf.mxu0
    %v359 = vadd.f32 0.0, %v358
    %v360 = vpop.f32.mrf.mxu0
    %361 = vmatprep.mubr.f32.mxu0 0.0
    %362 = vmatmul.mubr.f32.gmra.mxu0 %v237
    %v363 = vpop.f32.mrf.mxu0
    %v364 = vadd.f32 0.0, %v363
    %v365 = vpop.f32.mrf.mxu0
    %366 = vmatprep.mubr.f32.mxu0 0.0
    %367 = vmatmul.mubr.f32.gmra.mxu0 %v238
    %v368 = vpop.f32.mrf.mxu0
    %v369 = vadd.f32 0.0, %v368
    %v370 = vpop.f32.mrf.mxu0
    %371 = vmatprep.mubr.f32.mxu0 0.0
    %372 = vmatmul.mubr.f32.gmra.mxu0 %v239
    %v373 = vpop.f32.mrf.mxu0
    %v374 = vadd.f32 0.0, %v373
    %v375 = vpop.f32.mrf.mxu0
    %376 = vmatprep.mubr.f32.mxu0 0.0
    %377 = vmatmul.mubr.f32.gmra.mxu0 %v240
    %v378 = vpop.f32.mrf.mxu0
    %v379 = vadd.f32 0.0, %v378
    %v380 = vpop.f32.mrf.mxu0
    %381 = vmatprep.mubr.f32.mxu0 0.0
    %382 = vmatmul.mubr.f32.gmra.mxu0 %v241
    %v383 = vpop.f32.mrf.mxu0
    %v384 = vadd.f32 0.0, %v383
    %v385 = vpop.f32.mrf.mxu0
    %386 = vmatprep.mubr.f32.mxu0 0.0
    %387 = vmatmul.mubr.f32.gmra.mxu0 %v242
    %v388 = vpop.f32.mrf.mxu0
    %v389 = vadd.f32 0.0, %v388
    %v390 = vpop.f32.mrf.mxu0
    %391 = vmatprep.mubr.f32.mxu0 0.0
    %392 = vmatmul.mubr.f32.gmra.mxu0 %v243
    %v393 = vpop.f32.mrf.mxu0
    %v394 = vadd.f32 0.0, %v393
    %v395 = vpop.f32.mrf.mxu0
    %396 = vmatprep.mubr.f32.mxu0 0.0
    %397 = vmatmul.mubr.f32.gmra.mxu0 %v244
    %v398 = vpop.f32.mrf.mxu0
    %v399 = vadd.f32 0.0, %v398
    %v400 = vpop.f32.mrf.mxu0
    %401 = vmatprep.mubr.f32.mxu0 0.0
    %402 = vmatmul.mubr.f32.gmra.mxu0 %v245
    %v403 = vpop.f32.mrf.mxu0
    %v404 = vadd.f32 0.0, %v403
    %v405 = vpop.f32.mrf.mxu0
    %406 = vdwg.mxu0
    %v407 = vld [vmem:[%s5] sm:$0x1]
    %v409 = vlaneseq
    %v410 = vshrl.u32 %v409, 7
    %v411 = vsub.s32 0, %v410
    %v412 = vrot.slane %v407, %v411
    %vm414 = vcmask 64512
    %v416 = vsel %vm414, %v30, 0
    %418 = vmatprep.subr.mxu0 0.0
    %419 = vmatpush1.msra.mxu0 0.0
    %420 = vmatprep.subr.mxu0 0.0
    %421 = vmatpush1.msra.mxu0 0.0
    %422 = vmatprep.subr.mxu0 0.0
    %423 = vmatpush1.msra.mxu0 0.0
    %424 = vmatprep.subr.mxu0 0.0
    %425 = vmatpush1.msra.mxu0 0.0
    %426 = vmatprep.subr.mxu0 0.0
    %427 = vmatpush1.msra.mxu0 0.0
    %428 = vmatprep.subr.mxu0 0.0
    %429 = vmatpush1.msra.mxu0 0.0
    %430 = vmatprep.subr.mxu0 0.0
    %431 = vmatpush1.msra.mxu0 0.0
    %432 = vmatprep.subr.mxu0 0.0
    %433 = vmatpush1.msra.mxu0 0.0
    %434 = vmatprep.subr.mxu0 0.0
    %435 = vmatpush1.msra.mxu0 0.0
    %436 = vmatprep.subr.mxu0 0.0
    %437 = vmatpush1.msra.mxu0 0.0
    %438 = vmatprep.subr.mxu0 0.0
    %439 = vmatpush1.msra.mxu0 0.0
    %440 = vmatprep.subr.mxu0 0.0
    %441 = vmatpush1.msra.mxu0 0.0
    %442 = vmatprep.subr.mxu0 0.0
    %443 = vmatpush1.msra.mxu0 0.0
    %444 = vmatprep.subr.mxu0 0.0
    %445 = vmatpush1.msra.mxu0 0.0
    %446 = vmatprep.subr.mxu0 0.0
    %447 = vmatpush1.msra.mxu0 0.0
    %448 = vmatprep.subr.mxu0 0.0
    %449 = vmatpush1.msra.mxu0 %v329
    %450 = vmatprep.subr.mxu0 0.0
    %451 = vmatpush2.msra.mxu0 0.0
    %452 = vmatprep.subr.mxu0 0.0
    %453 = vmatpush2.msra.mxu0 0.0
    %454 = vmatprep.subr.mxu0 0.0
    %455 = vmatpush2.msra.mxu0 0.0
    %456 = vmatprep.subr.mxu0 0.0
    %457 = vmatpush2.msra.mxu0 0.0
    %458 = vmatprep.subr.mxu0 0.0
    %459 = vmatpush2.msra.mxu0 0.0
    %460 = vmatprep.subr.mxu0 0.0
    %461 = vmatpush2.msra.mxu0 0.0
    %462 = vmatprep.subr.mxu0 0.0
    %463 = vmatpush2.msra.mxu0 0.0
    %464 = vmatprep.subr.mxu0 0.0
    %465 = vmatpush2.msra.mxu0 0.0
    %466 = vmatprep.subr.mxu0 0.0
    %467 = vmatpush2.msra.mxu0 0.0
    %468 = vmatprep.subr.mxu0 0.0
    %469 = vmatpush2.msra.mxu0 0.0
    %470 = vmatprep.subr.mxu0 0.0
    %471 = vmatpush2.msra.mxu0 0.0
    %472 = vmatprep.subr.mxu0 0.0
    %473 = vmatpush2.msra.mxu0 0.0
    %474 = vmatprep.subr.mxu0 0.0
    %475 = vmatpush2.msra.mxu0 0.0
    %476 = vmatprep.subr.mxu0 0.0
    %477 = vmatpush2.msra.mxu0 0.0
    %478 = vmatprep.subr.mxu0 0.0
    %479 = vmatpush2.msra.mxu0 0.0
    %480 = vmatprep.subr.mxu0 0.0
    %481 = vmatpush2.msra.mxu0 0.0
    %482 = vmatprep.mubr.f32.mxu0 0.0
    %483 = vmatmul.mubr.f32.gmra.mxu0 %v416
    %v484 = vpop.f32.mrf.mxu0
    %v485 = vadd.f32 %v412, %v484
    %v486 = vpop.f32.mrf.mxu0
    %487 = vdwg.mxu0
    %v489 = vsel %vm414, %v31, 0
    %491 = vmatprep.subr.mxu0 0.0
    %492 = vmatpush1.msra.mxu0 0.0
    %493 = vmatprep.subr.mxu0 0.0
    %494 = vmatpush1.msra.mxu0 0.0
    %495 = vmatprep.subr.mxu0 0.0
    %496 = vmatpush1.msra.mxu0 0.0
    %497 = vmatprep.subr.mxu0 0.0
    %498 = vmatpush1.msra.mxu0 0.0
    %499 = vmatprep.subr.mxu0 0.0
    %500 = vmatpush1.msra.mxu0 0.0
    %501 = vmatprep.subr.mxu0 0.0
    %502 = vmatpush1.msra.mxu0 0.0
    %503 = vmatprep.subr.mxu0 0.0
    %504 = vmatpush1.msra.mxu0 0.0
    %505 = vmatprep.subr.mxu0 0.0
    %506 = vmatpush1.msra.mxu0 0.0
    %507 = vmatprep.subr.mxu0 0.0
    %508 = vmatpush1.msra.mxu0 0.0
    %509 = vmatprep.subr.mxu0 0.0
    %510 = vmatpush1.msra.mxu0 0.0
    %511 = vmatprep.subr.mxu0 0.0
    %512 = vmatpush1.msra.mxu0 0.0
    %513 = vmatprep.subr.mxu0 0.0
    %514 = vmatpush1.msra.mxu0 0.0
    %515 = vmatprep.subr.mxu0 0.0
    %516 = vmatpush1.msra.mxu0 0.0
    %517 = vmatprep.subr.mxu0 0.0
    %518 = vmatpush1.msra.mxu0 0.0
    %519 = vmatprep.subr.mxu0 0.0
    %520 = vmatpush1.msra.mxu0 0.0
    %521 = vmatprep.subr.mxu0 0.0
    %522 = vmatpush1.msra.mxu0 %v334
    %523 = vmatprep.subr.mxu0 0.0
    %524 = vmatpush2.msra.mxu0 0.0
    %525 = vmatprep.subr.mxu0 0.0
    %526 = vmatpush2.msra.mxu0 0.0
    %527 = vmatprep.subr.mxu0 0.0
    %528 = vmatpush2.msra.mxu0 0.0
    %529 = vmatprep.subr.mxu0 0.0
    %530 = vmatpush2.msra.mxu0 0.0
    %531 = vmatprep.subr.mxu0 0.0
    %532 = vmatpush2.msra.mxu0 0.0
    %533 = vmatprep.subr.mxu0 0.0
    %534 = vmatpush2.msra.mxu0 0.0
    %535 = vmatprep.subr.mxu0 0.0
    %536 = vmatpush2.msra.mxu0 0.0
    %537 = vmatprep.subr.mxu0 0.0
    %538 = vmatpush2.msra.mxu0 0.0
    %539 = vmatprep.subr.mxu0 0.0
    %540 = vmatpush2.msra.mxu0 0.0
    %541 = vmatprep.subr.mxu0 0.0
    %542 = vmatpush2.msra.mxu0 0.0
    %543 = vmatprep.subr.mxu0 0.0
    %544 = vmatpush2.msra.mxu0 0.0
    %545 = vmatprep.subr.mxu0 0.0
    %546 = vmatpush2.msra.mxu0 0.0
    %547 = vmatprep.subr.mxu0 0.0
    %548 = vmatpush2.msra.mxu0 0.0
    %549 = vmatprep.subr.mxu0 0.0
    %550 = vmatpush2.msra.mxu0 0.0
    %551 = vmatprep.subr.mxu0 0.0
    %552 = vmatpush2.msra.mxu0 0.0
    %553 = vmatprep.subr.mxu0 0.0
    %554 = vmatpush2.msra.mxu0 0.0
    %555 = vmatprep.mubr.f32.mxu0 0.0
    %556 = vmatmul.mubr.f32.gmra.mxu0 %v489
    %v557 = vpop.f32.mrf.mxu0
    %v558 = vadd.f32 %v412, %v557
    %v559 = vpop.f32.mrf.mxu0
    %560 = vdwg.mxu0
    %v562 = vsel %vm414, %v32, 0
    %564 = vmatprep.subr.mxu0 0.0
    %565 = vmatpush1.msra.mxu0 0.0
    %566 = vmatprep.subr.mxu0 0.0
    %567 = vmatpush1.msra.mxu0 0.0
    %568 = vmatprep.subr.mxu0 0.0
    %569 = vmatpush1.msra.mxu0 0.0
    %570 = vmatprep.subr.mxu0 0.0
    %571 = vmatpush1.msra.mxu0 0.0
    %572 = vmatprep.subr.mxu0 0.0
    %573 = vmatpush1.msra.mxu0 0.0
    %574 = vmatprep.subr.mxu0 0.0
    %575 = vmatpush1.msra.mxu0 0.0
    %576 = vmatprep.subr.mxu0 0.0
    %577 = vmatpush1.msra.mxu0 0.0
    %578 = vmatprep.subr.mxu0 0.0
    %579 = vmatpush1.msra.mxu0 0.0
    %580 = vmatprep.subr.mxu0 0.0
    %581 = vmatpush1.msra.mxu0 0.0
    %582 = vmatprep.subr.mxu0 0.0
    %583 = vmatpush1.msra.mxu0 0.0
    %584 = vmatprep.subr.mxu0 0.0
    %585 = vmatpush1.msra.mxu0 0.0
    %586 = vmatprep.subr.mxu0 0.0
    %587 = vmatpush1.msra.mxu0 0.0
    %588 = vmatprep.subr.mxu0 0.0
    %589 = vmatpush1.msra.mxu0 0.0
    %590 = vmatprep.subr.mxu0 0.0
    %591 = vmatpush1.msra.mxu0 0.0
    %592 = vmatprep.subr.mxu0 0.0
    %593 = vmatpush1.msra.mxu0 0.0
    %594 = vmatprep.subr.mxu0 0.0
    %595 = vmatpush1.msra.mxu0 %v339
    %596 = vmatprep.subr.mxu0 0.0
    %597 = vmatpush2.msra.mxu0 0.0
    %598 = vmatprep.subr.mxu0 0.0
    %599 = vmatpush2.msra.mxu0 0.0
    %600 = vmatprep.subr.mxu0 0.0
    %601 = vmatpush2.msra.mxu0 0.0
    %602 = vmatprep.subr.mxu0 0.0
    %603 = vmatpush2.msra.mxu0 0.0
    %604 = vmatprep.subr.mxu0 0.0
    %605 = vmatpush2.msra.mxu0 0.0
    %606 = vmatprep.subr.mxu0 0.0
    %607 = vmatpush2.msra.mxu0 0.0
    %608 = vmatprep.subr.mxu0 0.0
    %609 = vmatpush2.msra.mxu0 0.0
    %610 = vmatprep.subr.mxu0 0.0
    %611 = vmatpush2.msra.mxu0 0.0
    %612 = vmatprep.subr.mxu0 0.0
    %613 = vmatpush2.msra.mxu0 0.0
    %614 = vmatprep.subr.mxu0 0.0
    %615 = vmatpush2.msra.mxu0 0.0
    %616 = vmatprep.subr.mxu0 0.0
    %617 = vmatpush2.msra.mxu0 0.0
    %618 = vmatprep.subr.mxu0 0.0
    %619 = vmatpush2.msra.mxu0 0.0
    %620 = vmatprep.subr.mxu0 0.0
    %621 = vmatpush2.msra.mxu0 0.0
    %622 = vmatprep.subr.mxu0 0.0
    %623 = vmatpush2.msra.mxu0 0.0
    %624 = vmatprep.subr.mxu0 0.0
    %625 = vmatpush2.msra.mxu0 0.0
    %626 = vmatprep.subr.mxu0 0.0
    %627 = vmatpush2.msra.mxu0 0.0
    %628 = vmatprep.mubr.f32.mxu0 0.0
    %629 = vmatmul.mubr.f32.gmra.mxu0 %v562
    %v630 = vpop.f32.mrf.mxu0
    %v631 = vadd.f32 %v412, %v630
    %v632 = vpop.f32.mrf.mxu0
    %633 = vdwg.mxu0
    %v635 = vsel %vm414, %v33, 0
    %637 = vmatprep.subr.mxu0 0.0
    %638 = vmatpush1.msra.mxu0 0.0
    %639 = vmatprep.subr.mxu0 0.0
    %640 = vmatpush1.msra.mxu0 0.0
    %641 = vmatprep.subr.mxu0 0.0
    %642 = vmatpush1.msra.mxu0 0.0
    %643 = vmatprep.subr.mxu0 0.0
    %644 = vmatpush1.msra.mxu0 0.0
    %645 = vmatprep.subr.mxu0 0.0
    %646 = vmatpush1.msra.mxu0 0.0
    %647 = vmatprep.subr.mxu0 0.0
    %648 = vmatpush1.msra.mxu0 0.0
    %649 = vmatprep.subr.mxu0 0.0
    %650 = vmatpush1.msra.mxu0 0.0
    %651 = vmatprep.subr.mxu0 0.0
    %652 = vmatpush1.msra.mxu0 0.0
    %653 = vmatprep.subr.mxu0 0.0
    %654 = vmatpush1.msra.mxu0 0.0
    %655 = vmatprep.subr.mxu0 0.0
    %656 = vmatpush1.msra.mxu0 0.0
    %657 = vmatprep.subr.mxu0 0.0
    %658 = vmatpush1.msra.mxu0 0.0
    %659 = vmatprep.subr.mxu0 0.0
    %660 = vmatpush1.msra.mxu0 0.0
    %661 = vmatprep.subr.mxu0 0.0
    %662 = vmatpush1.msra.mxu0 0.0
    %663 = vmatprep.subr.mxu0 0.0
    %664 = vmatpush1.msra.mxu0 0.0
    %665 = vmatprep.subr.mxu0 0.0
    %666 = vmatpush1.msra.mxu0 0.0
    %667 = vmatprep.subr.mxu0 0.0
    %668 = vmatpush1.msra.mxu0 %v344
    %669 = vmatprep.subr.mxu0 0.0
    %670 = vmatpush2.msra.mxu0 0.0
    %671 = vmatprep.subr.mxu0 0.0
    %672 = vmatpush2.msra.mxu0 0.0
    %673 = vmatprep.subr.mxu0 0.0
    %674 = vmatpush2.msra.mxu0 0.0
    %675 = vmatprep.subr.mxu0 0.0
    %676 = vmatpush2.msra.mxu0 0.0
    %677 = vmatprep.subr.mxu0 0.0
    %678 = vmatpush2.msra.mxu0 0.0
    %679 = vmatprep.subr.mxu0 0.0
    %680 = vmatpush2.msra.mxu0 0.0
    %681 = vmatprep.subr.mxu0 0.0
    %682 = vmatpush2.msra.mxu0 0.0
    %683 = vmatprep.subr.mxu0 0.0
    %684 = vmatpush2.msra.mxu0 0.0
    %685 = vmatprep.subr.mxu0 0.0
    %686 = vmatpush2.msra.mxu0 0.0
    %687 = vmatprep.subr.mxu0 0.0
    %688 = vmatpush2.msra.mxu0 0.0
    %689 = vmatprep.subr.mxu0 0.0
    %690 = vmatpush2.msra.mxu0 0.0
    %691 = vmatprep.subr.mxu0 0.0
    %692 = vmatpush2.msra.mxu0 0.0
    %693 = vmatprep.subr.mxu0 0.0
    %694 = vmatpush2.msra.mxu0 0.0
    %695 = vmatprep.subr.mxu0 0.0
    %696 = vmatpush2.msra.mxu0 0.0
    %697 = vmatprep.subr.mxu0 0.0
    %698 = vmatpush2.msra.mxu0 0.0
    %699 = vmatprep.subr.mxu0 0.0
    %700 = vmatpush2.msra.mxu0 0.0
    %701 = vmatprep.mubr.f32.mxu0 0.0
    %702 = vmatmul.mubr.f32.gmra.mxu0 %v635
    %v703 = vpop.f32.mrf.mxu0
    %v704 = vadd.f32 %v412, %v703
    %v705 = vpop.f32.mrf.mxu0
    %706 = vdwg.mxu0
    %v708 = vsel %vm414, %v34, 0
    %710 = vmatprep.subr.mxu0 0.0
    %711 = vmatpush1.msra.mxu0 0.0
    %712 = vmatprep.subr.mxu0 0.0
    %713 = vmatpush1.msra.mxu0 0.0
    %714 = vmatprep.subr.mxu0 0.0
    %715 = vmatpush1.msra.mxu0 0.0
    %716 = vmatprep.subr.mxu0 0.0
    %717 = vmatpush1.msra.mxu0 0.0
    %718 = vmatprep.subr.mxu0 0.0
    %719 = vmatpush1.msra.mxu0 0.0
    %720 = vmatprep.subr.mxu0 0.0
    %721 = vmatpush1.msra.mxu0 0.0
    %722 = vmatprep.subr.mxu0 0.0
    %723 = vmatpush1.msra.mxu0 0.0
    %724 = vmatprep.subr.mxu0 0.0
    %725 = vmatpush1.msra.mxu0 0.0
    %726 = vmatprep.subr.mxu0 0.0
    %727 = vmatpush1.msra.mxu0 0.0
    %728 = vmatprep.subr.mxu0 0.0
    %729 = vmatpush1.msra.mxu0 0.0
    %730 = vmatprep.subr.mxu0 0.0
    %731 = vmatpush1.msra.mxu0 0.0
    %732 = vmatprep.subr.mxu0 0.0
    %733 = vmatpush1.msra.mxu0 0.0
    %734 = vmatprep.subr.mxu0 0.0
    %735 = vmatpush1.msra.mxu0 0.0
    %736 = vmatprep.subr.mxu0 0.0
    %737 = vmatpush1.msra.mxu0 0.0
    %738 = vmatprep.subr.mxu0 0.0
    %739 = vmatpush1.msra.mxu0 0.0
    %740 = vmatprep.subr.mxu0 0.0
    %741 = vmatpush1.msra.mxu0 %v349
    %742 = vmatprep.subr.mxu0 0.0
    %743 = vmatpush2.msra.mxu0 0.0
    %744 = vmatprep.subr.mxu0 0.0
    %745 = vmatpush2.msra.mxu0 0.0
    %746 = vmatprep.subr.mxu0 0.0
    %747 = vmatpush2.msra.mxu0 0.0
    %748 = vmatprep.subr.mxu0 0.0
    %749 = vmatpush2.msra.mxu0 0.0
    %750 = vmatprep.subr.mxu0 0.0
    %751 = vmatpush2.msra.mxu0 0.0
    %752 = vmatprep.subr.mxu0 0.0
    %753 = vmatpush2.msra.mxu0 0.0
    %754 = vmatprep.subr.mxu0 0.0
    %755 = vmatpush2.msra.mxu0 0.0
    %756 = vmatprep.subr.mxu0 0.0
    %757 = vmatpush2.msra.mxu0 0.0
    %758 = vmatprep.subr.mxu0 0.0
    %759 = vmatpush2.msra.mxu0 0.0
    %760 = vmatprep.subr.mxu0 0.0
    %761 = vmatpush2.msra.mxu0 0.0
    %762 = vmatprep.subr.mxu0 0.0
    %763 = vmatpush2.msra.mxu0 0.0
    %764 = vmatprep.subr.mxu0 0.0
    %765 = vmatpush2.msra.mxu0 0.0
    %766 = vmatprep.subr.mxu0 0.0
    %767 = vmatpush2.msra.mxu0 0.0
    %768 = vmatprep.subr.mxu0 0.0
    %769 = vmatpush2.msra.mxu0 0.0
    %770 = vmatprep.subr.mxu0 0.0
    %771 = vmatpush2.msra.mxu0 0.0
    %772 = vmatprep.subr.mxu0 0.0
    %773 = vmatpush2.msra.mxu0 0.0
    %774 = vmatprep.mubr.f32.mxu0 0.0
    %775 = vmatmul.mubr.f32.gmra.mxu0 %v708
    %v776 = vpop.f32.mrf.mxu0
    %v777 = vadd.f32 %v412, %v776
    %v778 = vpop.f32.mrf.mxu0
    %779 = vdwg.mxu0
    %v781 = vsel %vm414, %v35, 0
    %783 = vmatprep.subr.mxu0 0.0
    %784 = vmatpush1.msra.mxu0 0.0
    %785 = vmatprep.subr.mxu0 0.0
    %786 = vmatpush1.msra.mxu0 0.0
    %787 = vmatprep.subr.mxu0 0.0
    %788 = vmatpush1.msra.mxu0 0.0
    %789 = vmatprep.subr.mxu0 0.0
    %790 = vmatpush1.msra.mxu0 0.0
    %791 = vmatprep.subr.mxu0 0.0
    %792 = vmatpush1.msra.mxu0 0.0
    %793 = vmatprep.subr.mxu0 0.0
    %794 = vmatpush1.msra.mxu0 0.0
    %795 = vmatprep.subr.mxu0 0.0
    %796 = vmatpush1.msra.mxu0 0.0
    %797 = vmatprep.subr.mxu0 0.0
    %798 = vmatpush1.msra.mxu0 0.0
    %799 = vmatprep.subr.mxu0 0.0
    %800 = vmatpush1.msra.mxu0 0.0
    %801 = vmatprep.subr.mxu0 0.0
    %802 = vmatpush1.msra.mxu0 0.0
    %803 = vmatprep.subr.mxu0 0.0
    %804 = vmatpush1.msra.mxu0 0.0
    %805 = vmatprep.subr.mxu0 0.0
    %806 = vmatpush1.msra.mxu0 0.0
    %807 = vmatprep.subr.mxu0 0.0
    %808 = vmatpush1.msra.mxu0 0.0
    %809 = vmatprep.subr.mxu0 0.0
    %810 = vmatpush1.msra.mxu0 0.0
    %811 = vmatprep.subr.mxu0 0.0
    %812 = vmatpush1.msra.mxu0 0.0
    %813 = vmatprep.subr.mxu0 0.0
    %814 = vmatpush1.msra.mxu0 %v354
    %815 = vmatprep.subr.mxu0 0.0
    %816 = vmatpush2.msra.mxu0 0.0
    %817 = vmatprep.subr.mxu0 0.0
    %818 = vmatpush2.msra.mxu0 0.0
    %819 = vmatprep.subr.mxu0 0.0
    %820 = vmatpush2.msra.mxu0 0.0
    %821 = vmatprep.subr.mxu0 0.0
    %822 = vmatpush2.msra.mxu0 0.0
    %823 = vmatprep.subr.mxu0 0.0
    %824 = vmatpush2.msra.mxu0 0.0
    %825 = vmatprep.subr.mxu0 0.0
    %826 = vmatpush2.msra.mxu0 0.0
    %827 = vmatprep.subr.mxu0 0.0
    %828 = vmatpush2.msra.mxu0 0.0
    %829 = vmatprep.subr.mxu0 0.0
    %830 = vmatpush2.msra.mxu0 0.0
    %831 = vmatprep.subr.mxu0 0.0
    %832 = vmatpush2.msra.mxu0 0.0
    %833 = vmatprep.subr.mxu0 0.0
    %834 = vmatpush2.msra.mxu0 0.0
    %835 = vmatprep.subr.mxu0 0.0
    %836 = vmatpush2.msra.mxu0 0.0
    %837 = vmatprep.subr.mxu0 0.0
    %838 = vmatpush2.msra.mxu0 0.0
    %839 = vmatprep.subr.mxu0 0.0
    %840 = vmatpush2.msra.mxu0 0.0
    %841 = vmatprep.subr.mxu0 0.0
    %842 = vmatpush2.msra.mxu0 0.0
    %843 = vmatprep.subr.mxu0 0.0
    %844 = vmatpush2.msra.mxu0 0.0
    %845 = vmatprep.subr.mxu0 0.0
    %846 = vmatpush2.msra.mxu0 0.0
    %847 = vmatprep.mubr.f32.mxu0 0.0
    %848 = vmatmul.mubr.f32.gmra.mxu0 %v781
    %v849 = vpop.f32.mrf.mxu0
    %v850 = vadd.f32 %v412, %v849
    %v851 = vpop.f32.mrf.mxu0
    %852 = vdwg.mxu0
    %v854 = vsel %vm414, %v36, 0
    %856 = vmatprep.subr.mxu0 0.0
    %857 = vmatpush1.msra.mxu0 0.0
    %858 = vmatprep.subr.mxu0 0.0
    %859 = vmatpush1.msra.mxu0 0.0
    %860 = vmatprep.subr.mxu0 0.0
    %861 = vmatpush1.msra.mxu0 0.0
    %862 = vmatprep.subr.mxu0 0.0
    %863 = vmatpush1.msra.mxu0 0.0
    %864 = vmatprep.subr.mxu0 0.0
    %865 = vmatpush1.msra.mxu0 0.0
    %866 = vmatprep.subr.mxu0 0.0
    %867 = vmatpush1.msra.mxu0 0.0
    %868 = vmatprep.subr.mxu0 0.0
    %869 = vmatpush1.msra.mxu0 0.0
    %870 = vmatprep.subr.mxu0 0.0
    %871 = vmatpush1.msra.mxu0 0.0
    %872 = vmatprep.subr.mxu0 0.0
    %873 = vmatpush1.msra.mxu0 0.0
    %874 = vmatprep.subr.mxu0 0.0
    %875 = vmatpush1.msra.mxu0 0.0
    %876 = vmatprep.subr.mxu0 0.0
    %877 = vmatpush1.msra.mxu0 0.0
    %878 = vmatprep.subr.mxu0 0.0
    %879 = vmatpush1.msra.mxu0 0.0
    %880 = vmatprep.subr.mxu0 0.0
    %881 = vmatpush1.msra.mxu0 0.0
    %882 = vmatprep.subr.mxu0 0.0
    %883 = vmatpush1.msra.mxu0 0.0
    %884 = vmatprep.subr.mxu0 0.0
    %885 = vmatpush1.msra.mxu0 0.0
    %886 = vmatprep.subr.mxu0 0.0
    %887 = vmatpush1.msra.mxu0 %v359
    %888 = vmatprep.subr.mxu0 0.0
    %889 = vmatpush2.msra.mxu0 0.0
    %890 = vmatprep.subr.mxu0 0.0
    %891 = vmatpush2.msra.mxu0 0.0
    %892 = vmatprep.subr.mxu0 0.0
    %893 = vmatpush2.msra.mxu0 0.0
    %894 = vmatprep.subr.mxu0 0.0
    %895 = vmatpush2.msra.mxu0 0.0
    %896 = vmatprep.subr.mxu0 0.0
    %897 = vmatpush2.msra.mxu0 0.0
    %898 = vmatprep.subr.mxu0 0.0
    %899 = vmatpush2.msra.mxu0 0.0
    %900 = vmatprep.subr.mxu0 0.0
    %901 = vmatpush2.msra.mxu0 0.0
    %902 = vmatprep.subr.mxu0 0.0
    %903 = vmatpush2.msra.mxu0 0.0
    %904 = vmatprep.subr.mxu0 0.0
    %905 = vmatpush2.msra.mxu0 0.0
    %906 = vmatprep.subr.mxu0 0.0
    %907 = vmatpush2.msra.mxu0 0.0
    %908 = vmatprep.subr.mxu0 0.0
    %909 = vmatpush2.msra.mxu0 0.0
    %910 = vmatprep.subr.mxu0 0.0
    %911 = vmatpush2.msra.mxu0 0.0
    %912 = vmatprep.subr.mxu0 0.0
    %913 = vmatpush2.msra.mxu0 0.0
    %914 = vmatprep.subr.mxu0 0.0
    %915 = vmatpush2.msra.mxu0 0.0
    %916 = vmatprep.subr.mxu0 0.0
    %917 = vmatpush2.msra.mxu0 0.0
    %918 = vmatprep.subr.mxu0 0.0
    %919 = vmatpush2.msra.mxu0 0.0
    %920 = vmatprep.mubr.f32.mxu0 0.0
    %921 = vmatmul.mubr.f32.gmra.mxu0 %v854
    %v922 = vpop.f32.mrf.mxu0
    %v923 = vadd.f32 %v412, %v922
    %v924 = vpop.f32.mrf.mxu0
    %925 = vdwg.mxu0
    %v927 = vsel %vm414, %v37, 0
    %929 = vmatprep.subr.mxu0 0.0
    %930 = vmatpush1.msra.mxu0 0.0
    %931 = vmatprep.subr.mxu0 0.0
    %932 = vmatpush1.msra.mxu0 0.0
    %933 = vmatprep.subr.mxu0 0.0
    %934 = vmatpush1.msra.mxu0 0.0
    %935 = vmatprep.subr.mxu0 0.0
    %936 = vmatpush1.msra.mxu0 0.0
    %937 = vmatprep.subr.mxu0 0.0
    %938 = vmatpush1.msra.mxu0 0.0
    %939 = vmatprep.subr.mxu0 0.0
    %940 = vmatpush1.msra.mxu0 0.0
    %941 = vmatprep.subr.mxu0 0.0
    %942 = vmatpush1.msra.mxu0 0.0
    %943 = vmatprep.subr.mxu0 0.0
    %944 = vmatpush1.msra.mxu0 0.0
    %945 = vmatprep.subr.mxu0 0.0
    %946 = vmatpush1.msra.mxu0 0.0
    %947 = vmatprep.subr.mxu0 0.0
    %948 = vmatpush1.msra.mxu0 0.0
    %949 = vmatprep.subr.mxu0 0.0
    %950 = vmatpush1.msra.mxu0 0.0
    %951 = vmatprep.subr.mxu0 0.0
    %952 = vmatpush1.msra.mxu0 0.0
    %953 = vmatprep.subr.mxu0 0.0
    %954 = vmatpush1.msra.mxu0 0.0
    %955 = vmatprep.subr.mxu0 0.0
    %956 = vmatpush1.msra.mxu0 0.0
    %957 = vmatprep.subr.mxu0 0.0
    %958 = vmatpush1.msra.mxu0 0.0
    %959 = vmatprep.subr.mxu0 0.0
    %960 = vmatpush1.msra.mxu0 %v364
    %961 = vmatprep.subr.mxu0 0.0
    %962 = vmatpush2.msra.mxu0 0.0
    %963 = vmatprep.subr.mxu0 0.0
    %964 = vmatpush2.msra.mxu0 0.0
    %965 = vmatprep.subr.mxu0 0.0
    %966 = vmatpush2.msra.mxu0 0.0
    %967 = vmatprep.subr.mxu0 0.0
    %968 = vmatpush2.msra.mxu0 0.0
    %969 = vmatprep.subr.mxu0 0.0
    %970 = vmatpush2.msra.mxu0 0.0
    %971 = vmatprep.subr.mxu0 0.0
    %972 = vmatpush2.msra.mxu0 0.0
    %973 = vmatprep.subr.mxu0 0.0
    %974 = vmatpush2.msra.mxu0 0.0
    %975 = vmatprep.subr.mxu0 0.0
    %976 = vmatpush2.msra.mxu0 0.0
    %977 = vmatprep.subr.mxu0 0.0
    %978 = vmatpush2.msra.mxu0 0.0
    %979 = vmatprep.subr.mxu0 0.0
    %980 = vmatpush2.msra.mxu0 0.0
    %981 = vmatprep.subr.mxu0 0.0
    %982 = vmatpush2.msra.mxu0 0.0
    %983 = vmatprep.subr.mxu0 0.0
    %984 = vmatpush2.msra.mxu0 0.0
    %985 = vmatprep.subr.mxu0 0.0
    %986 = vmatpush2.msra.mxu0 0.0
    %987 = vmatprep.subr.mxu0 0.0
    %988 = vmatpush2.msra.mxu0 0.0
    %989 = vmatprep.subr.mxu0 0.0
    %990 = vmatpush2.msra.mxu0 0.0
    %991 = vmatprep.subr.mxu0 0.0
    %992 = vmatpush2.msra.mxu0 0.0
    %993 = vmatprep.mubr.f32.mxu0 0.0
    %994 = vmatmul.mubr.f32.gmra.mxu0 %v927
    %v995 = vpop.f32.mrf.mxu0
    %v996 = vadd.f32 %v412, %v995
    %v997 = vpop.f32.mrf.mxu0
    %998 = vdwg.mxu0
    %v1000 = vsel %vm414, %v38, 0
    %1002 = vmatprep.subr.mxu0 0.0
    %1003 = vmatpush1.msra.mxu0 0.0
    %1004 = vmatprep.subr.mxu0 0.0
    %1005 = vmatpush1.msra.mxu0 0.0
    %1006 = vmatprep.subr.mxu0 0.0
    %1007 = vmatpush1.msra.mxu0 0.0
    %1008 = vmatprep.subr.mxu0 0.0
    %1009 = vmatpush1.msra.mxu0 0.0
    %1010 = vmatprep.subr.mxu0 0.0
    %1011 = vmatpush1.msra.mxu0 0.0
    %1012 = vmatprep.subr.mxu0 0.0
    %1013 = vmatpush1.msra.mxu0 0.0
    %1014 = vmatprep.subr.mxu0 0.0
    %1015 = vmatpush1.msra.mxu0 0.0
    %1016 = vmatprep.subr.mxu0 0.0
    %1017 = vmatpush1.msra.mxu0 0.0
    %1018 = vmatprep.subr.mxu0 0.0
    %1019 = vmatpush1.msra.mxu0 0.0
    %1020 = vmatprep.subr.mxu0 0.0
    %1021 = vmatpush1.msra.mxu0 0.0
    %1022 = vmatprep.subr.mxu0 0.0
    %1023 = vmatpush1.msra.mxu0 0.0
    %1024 = vmatprep.subr.mxu0 0.0
    %1025 = vmatpush1.msra.mxu0 0.0
    %1026 = vmatprep.subr.mxu0 0.0
    %1027 = vmatpush1.msra.mxu0 0.0
    %1028 = vmatprep.subr.mxu0 0.0
    %1029 = vmatpush1.msra.mxu0 0.0
    %1030 = vmatprep.subr.mxu0 0.0
    %1031 = vmatpush1.msra.mxu0 0.0
    %1032 = vmatprep.subr.mxu0 0.0
    %1033 = vmatpush1.msra.mxu0 %v369
    %1034 = vmatprep.subr.mxu0 0.0
    %1035 = vmatpush2.msra.mxu0 0.0
    %1036 = vmatprep.subr.mxu0 0.0
    %1037 = vmatpush2.msra.mxu0 0.0
    %1038 = vmatprep.subr.mxu0 0.0
    %1039 = vmatpush2.msra.mxu0 0.0
    %1040 = vmatprep.subr.mxu0 0.0
    %1041 = vmatpush2.msra.mxu0 0.0
    %1042 = vmatprep.subr.mxu0 0.0
    %1043 = vmatpush2.msra.mxu0 0.0
    %1044 = vmatprep.subr.mxu0 0.0
    %1045 = vmatpush2.msra.mxu0 0.0
    %1046 = vmatprep.subr.mxu0 0.0
    %1047 = vmatpush2.msra.mxu0 0.0
    %1048 = vmatprep.subr.mxu0 0.0
    %1049 = vmatpush2.msra.mxu0 0.0
    %1050 = vmatprep.subr.mxu0 0.0
    %1051 = vmatpush2.msra.mxu0 0.0
    %1052 = vmatprep.subr.mxu0 0.0
    %1053 = vmatpush2.msra.mxu0 0.0
    %1054 = vmatprep.subr.mxu0 0.0
    %1055 = vmatpush2.msra.mxu0 0.0
    %1056 = vmatprep.subr.mxu0 0.0
    %1057 = vmatpush2.msra.mxu0 0.0
    %1058 = vmatprep.subr.mxu0 0.0
    %1059 = vmatpush2.msra.mxu0 0.0
    %1060 = vmatprep.subr.mxu0 0.0
    %1061 = vmatpush2.msra.mxu0 0.0
    %1062 = vmatprep.subr.mxu0 0.0
    %1063 = vmatpush2.msra.mxu0 0.0
    %1064 = vmatprep.subr.mxu0 0.0
    %1065 = vmatpush2.msra.mxu0 0.0
    %1066 = vmatprep.mubr.f32.mxu0 0.0
    %1067 = vmatmul.mubr.f32.gmra.mxu0 %v1000
    %v1068 = vpop.f32.mrf.mxu0
    %v1069 = vadd.f32 %v412, %v1068
    %v1070 = vpop.f32.mrf.mxu0
    %1071 = vdwg.mxu0
    %v1073 = vsel %vm414, %v39, 0
    %1075 = vmatprep.subr.mxu0 0.0
    %1076 = vmatpush1.msra.mxu0 0.0
    %1077 = vmatprep.subr.mxu0 0.0
    %1078 = vmatpush1.msra.mxu0 0.0
    %1079 = vmatprep.subr.mxu0 0.0
    %1080 = vmatpush1.msra.mxu0 0.0
    %1081 = vmatprep.subr.mxu0 0.0
    %1082 = vmatpush1.msra.mxu0 0.0
    %1083 = vmatprep.subr.mxu0 0.0
    %1084 = vmatpush1.msra.mxu0 0.0
    %1085 = vmatprep.subr.mxu0 0.0
    %1086 = vmatpush1.msra.mxu0 0.0
    %1087 = vmatprep.subr.mxu0 0.0
    %1088 = vmatpush1.msra.mxu0 0.0
    %1089 = vmatprep.subr.mxu0 0.0
    %1090 = vmatpush1.msra.mxu0 0.0
    %1091 = vmatprep.subr.mxu0 0.0
    %1092 = vmatpush1.msra.mxu0 0.0
    %1093 = vmatprep.subr.mxu0 0.0
    %1094 = vmatpush1.msra.mxu0 0.0
    %1095 = vmatprep.subr.mxu0 0.0
    %1096 = vmatpush1.msra.mxu0 0.0
    %1097 = vmatprep.subr.mxu0 0.0
    %1098 = vmatpush1.msra.mxu0 0.0
    %1099 = vmatprep.subr.mxu0 0.0
    %1100 = vmatpush1.msra.mxu0 0.0
    %1101 = vmatprep.subr.mxu0 0.0
    %1102 = vmatpush1.msra.mxu0 0.0
    %1103 = vmatprep.subr.mxu0 0.0
    %1104 = vmatpush1.msra.mxu0 0.0
    %1105 = vmatprep.subr.mxu0 0.0
    %1106 = vmatpush1.msra.mxu0 %v374
    %1107 = vmatprep.subr.mxu0 0.0
    %1108 = vmatpush2.msra.mxu0 0.0
    %1109 = vmatprep.subr.mxu0 0.0
    %1110 = vmatpush2.msra.mxu0 0.0
    %1111 = vmatprep.subr.mxu0 0.0
    %1112 = vmatpush2.msra.mxu0 0.0
    %1113 = vmatprep.subr.mxu0 0.0
    %1114 = vmatpush2.msra.mxu0 0.0
    %1115 = vmatprep.subr.mxu0 0.0
    %1116 = vmatpush2.msra.mxu0 0.0
    %1117 = vmatprep.subr.mxu0 0.0
    %1118 = vmatpush2.msra.mxu0 0.0
    %1119 = vmatprep.subr.mxu0 0.0
    %1120 = vmatpush2.msra.mxu0 0.0
    %1121 = vmatprep.subr.mxu0 0.0
    %1122 = vmatpush2.msra.mxu0 0.0
    %1123 = vmatprep.subr.mxu0 0.0
    %1124 = vmatpush2.msra.mxu0 0.0
    %1125 = vmatprep.subr.mxu0 0.0
    %1126 = vmatpush2.msra.mxu0 0.0
    %1127 = vmatprep.subr.mxu0 0.0
    %1128 = vmatpush2.msra.mxu0 0.0
    %1129 = vmatprep.subr.mxu0 0.0
    %1130 = vmatpush2.msra.mxu0 0.0
    %1131 = vmatprep.subr.mxu0 0.0
    %1132 = vmatpush2.msra.mxu0 0.0
    %1133 = vmatprep.subr.mxu0 0.0
    %1134 = vmatpush2.msra.mxu0 0.0
    %1135 = vmatprep.subr.mxu0 0.0
    %1136 = vmatpush2.msra.mxu0 0.0
    %1137 = vmatprep.subr.mxu0 0.0
    %1138 = vmatpush2.msra.mxu0 0.0
    %1139 = vmatprep.mubr.f32.mxu0 0.0
    %1140 = vmatmul.mubr.f32.gmra.mxu0 %v1073
    %v1141 = vpop.f32.mrf.mxu0
    %v1142 = vadd.f32 %v412, %v1141
    %v1143 = vpop.f32.mrf.mxu0
    %1144 = vdwg.mxu0
    %v1146 = vsel %vm414, %v40, 0
    %1148 = vmatprep.subr.mxu0 0.0
    %1149 = vmatpush1.msra.mxu0 0.0
    %1150 = vmatprep.subr.mxu0 0.0
    %1151 = vmatpush1.msra.mxu0 0.0
    %1152 = vmatprep.subr.mxu0 0.0
    %1153 = vmatpush1.msra.mxu0 0.0
    %1154 = vmatprep.subr.mxu0 0.0
    %1155 = vmatpush1.msra.mxu0 0.0
    %1156 = vmatprep.subr.mxu0 0.0
    %1157 = vmatpush1.msra.mxu0 0.0
    %1158 = vmatprep.subr.mxu0 0.0
    %1159 = vmatpush1.msra.mxu0 0.0
    %1160 = vmatprep.subr.mxu0 0.0
    %1161 = vmatpush1.msra.mxu0 0.0
    %1162 = vmatprep.subr.mxu0 0.0
    %1163 = vmatpush1.msra.mxu0 0.0
    %1164 = vmatprep.subr.mxu0 0.0
    %1165 = vmatpush1.msra.mxu0 0.0
    %1166 = vmatprep.subr.mxu0 0.0
    %1167 = vmatpush1.msra.mxu0 0.0
    %1168 = vmatprep.subr.mxu0 0.0
    %1169 = vmatpush1.msra.mxu0 0.0
    %1170 = vmatprep.subr.mxu0 0.0
    %1171 = vmatpush1.msra.mxu0 0.0
    %1172 = vmatprep.subr.mxu0 0.0
    %1173 = vmatpush1.msra.mxu0 0.0
    %1174 = vmatprep.subr.mxu0 0.0
    %1175 = vmatpush1.msra.mxu0 0.0
    %1176 = vmatprep.subr.mxu0 0.0
    %1177 = vmatpush1.msra.mxu0 0.0
    %1178 = vmatprep.subr.mxu0 0.0
    %1179 = vmatpush1.msra.mxu0 %v379
    %1180 = vmatprep.subr.mxu0 0.0
    %1181 = vmatpush2.msra.mxu0 0.0
    %1182 = vmatprep.subr.mxu0 0.0
    %1183 = vmatpush2.msra.mxu0 0.0
    %1184 = vmatprep.subr.mxu0 0.0
    %1185 = vmatpush2.msra.mxu0 0.0
    %1186 = vmatprep.subr.mxu0 0.0
    %1187 = vmatpush2.msra.mxu0 0.0
    %1188 = vmatprep.subr.mxu0 0.0
    %1189 = vmatpush2.msra.mxu0 0.0
    %1190 = vmatprep.subr.mxu0 0.0
    %1191 = vmatpush2.msra.mxu0 0.0
    %1192 = vmatprep.subr.mxu0 0.0
    %1193 = vmatpush2.msra.mxu0 0.0
    %1194 = vmatprep.subr.mxu0 0.0
    %1195 = vmatpush2.msra.mxu0 0.0
    %1196 = vmatprep.subr.mxu0 0.0
    %1197 = vmatpush2.msra.mxu0 0.0
    %1198 = vmatprep.subr.mxu0 0.0
    %1199 = vmatpush2.msra.mxu0 0.0
    %1200 = vmatprep.subr.mxu0 0.0
    %1201 = vmatpush2.msra.mxu0 0.0
    %1202 = vmatprep.subr.mxu0 0.0
    %1203 = vmatpush2.msra.mxu0 0.0
    %1204 = vmatprep.subr.mxu0 0.0
    %1205 = vmatpush2.msra.mxu0 0.0
    %1206 = vmatprep.subr.mxu0 0.0
    %1207 = vmatpush2.msra.mxu0 0.0
    %1208 = vmatprep.subr.mxu0 0.0
    %1209 = vmatpush2.msra.mxu0 0.0
    %1210 = vmatprep.subr.mxu0 0.0
    %1211 = vmatpush2.msra.mxu0 0.0
    %1212 = vmatprep.mubr.f32.mxu0 0.0
    %1213 = vmatmul.mubr.f32.gmra.mxu0 %v1146
    %v1214 = vpop.f32.mrf.mxu0
    %v1215 = vadd.f32 %v412, %v1214
    %v1216 = vpop.f32.mrf.mxu0
    %1217 = vdwg.mxu0
    %v1219 = vsel %vm414, %v41, 0
    %1221 = vmatprep.subr.mxu0 0.0
    %1222 = vmatpush1.msra.mxu0 0.0
    %1223 = vmatprep.subr.mxu0 0.0
    %1224 = vmatpush1.msra.mxu0 0.0
    %1225 = vmatprep.subr.mxu0 0.0
    %1226 = vmatpush1.msra.mxu0 0.0
    %1227 = vmatprep.subr.mxu0 0.0
    %1228 = vmatpush1.msra.mxu0 0.0
    %1229 = vmatprep.subr.mxu0 0.0
    %1230 = vmatpush1.msra.mxu0 0.0
    %1231 = vmatprep.subr.mxu0 0.0
    %1232 = vmatpush1.msra.mxu0 0.0
    %1233 = vmatprep.subr.mxu0 0.0
    %1234 = vmatpush1.msra.mxu0 0.0
    %1235 = vmatprep.subr.mxu0 0.0
    %1236 = vmatpush1.msra.mxu0 0.0
    %1237 = vmatprep.subr.mxu0 0.0
    %1238 = vmatpush1.msra.mxu0 0.0
    %1239 = vmatprep.subr.mxu0 0.0
    %1240 = vmatpush1.msra.mxu0 0.0
    %1241 = vmatprep.subr.mxu0 0.0
    %1242 = vmatpush1.msra.mxu0 0.0
    %1243 = vmatprep.subr.mxu0 0.0
    %1244 = vmatpush1.msra.mxu0 0.0
    %1245 = vmatprep.subr.mxu0 0.0
    %1246 = vmatpush1.msra.mxu0 0.0
    %1247 = vmatprep.subr.mxu0 0.0
    %1248 = vmatpush1.msra.mxu0 0.0
    %1249 = vmatprep.subr.mxu0 0.0
    %1250 = vmatpush1.msra.mxu0 0.0
    %1251 = vmatprep.subr.mxu0 0.0
    %1252 = vmatpush1.msra.mxu0 %v384
    %1253 = vmatprep.subr.mxu0 0.0
    %1254 = vmatpush2.msra.mxu0 0.0
    %1255 = vmatprep.subr.mxu0 0.0
    %1256 = vmatpush2.msra.mxu0 0.0
    %1257 = vmatprep.subr.mxu0 0.0
    %1258 = vmatpush2.msra.mxu0 0.0
    %1259 = vmatprep.subr.mxu0 0.0
    %1260 = vmatpush2.msra.mxu0 0.0
    %1261 = vmatprep.subr.mxu0 0.0
    %1262 = vmatpush2.msra.mxu0 0.0
    %1263 = vmatprep.subr.mxu0 0.0
    %1264 = vmatpush2.msra.mxu0 0.0
    %1265 = vmatprep.subr.mxu0 0.0
    %1266 = vmatpush2.msra.mxu0 0.0
    %1267 = vmatprep.subr.mxu0 0.0
    %1268 = vmatpush2.msra.mxu0 0.0
    %1269 = vmatprep.subr.mxu0 0.0
    %1270 = vmatpush2.msra.mxu0 0.0
    %1271 = vmatprep.subr.mxu0 0.0
    %1272 = vmatpush2.msra.mxu0 0.0
    %1273 = vmatprep.subr.mxu0 0.0
    %1274 = vmatpush2.msra.mxu0 0.0
    %1275 = vmatprep.subr.mxu0 0.0
    %1276 = vmatpush2.msra.mxu0 0.0
    %1277 = vmatprep.subr.mxu0 0.0
    %1278 = vmatpush2.msra.mxu0 0.0
    %1279 = vmatprep.subr.mxu0 0.0
    %1280 = vmatpush2.msra.mxu0 0.0
    %1281 = vmatprep.subr.mxu0 0.0
    %1282 = vmatpush2.msra.mxu0 0.0
    %1283 = vmatprep.subr.mxu0 0.0
    %1284 = vmatpush2.msra.mxu0 0.0
    %1285 = vmatprep.mubr.f32.mxu0 0.0
    %1286 = vmatmul.mubr.f32.gmra.mxu0 %v1219
    %v1287 = vpop.f32.mrf.mxu0
    %v1288 = vadd.f32 %v412, %v1287
    %v1289 = vpop.f32.mrf.mxu0
    %1290 = vdwg.mxu0
    %v1292 = vsel %vm414, %v42, 0
    %1294 = vmatprep.subr.mxu0 0.0
    %1295 = vmatpush1.msra.mxu0 0.0
    %1296 = vmatprep.subr.mxu0 0.0
    %1297 = vmatpush1.msra.mxu0 0.0
    %1298 = vmatprep.subr.mxu0 0.0
    %1299 = vmatpush1.msra.mxu0 0.0
    %1300 = vmatprep.subr.mxu0 0.0
    %1301 = vmatpush1.msra.mxu0 0.0
    %1302 = vmatprep.subr.mxu0 0.0
    %1303 = vmatpush1.msra.mxu0 0.0
    %1304 = vmatprep.subr.mxu0 0.0
    %1305 = vmatpush1.msra.mxu0 0.0
    %1306 = vmatprep.subr.mxu0 0.0
    %1307 = vmatpush1.msra.mxu0 0.0
    %1308 = vmatprep.subr.mxu0 0.0
    %1309 = vmatpush1.msra.mxu0 0.0
    %1310 = vmatprep.subr.mxu0 0.0
    %1311 = vmatpush1.msra.mxu0 0.0
    %1312 = vmatprep.subr.mxu0 0.0
    %1313 = vmatpush1.msra.mxu0 0.0
    %1314 = vmatprep.subr.mxu0 0.0
    %1315 = vmatpush1.msra.mxu0 0.0
    %1316 = vmatprep.subr.mxu0 0.0
    %1317 = vmatpush1.msra.mxu0 0.0
    %1318 = vmatprep.subr.mxu0 0.0
    %1319 = vmatpush1.msra.mxu0 0.0
    %1320 = vmatprep.subr.mxu0 0.0
    %1321 = vmatpush1.msra.mxu0 0.0
    %1322 = vmatprep.subr.mxu0 0.0
    %1323 = vmatpush1.msra.mxu0 0.0
    %1324 = vmatprep.subr.mxu0 0.0
    %1325 = vmatpush1.msra.mxu0 %v389
    %1326 = vmatprep.subr.mxu0 0.0
    %1327 = vmatpush2.msra.mxu0 0.0
    %1328 = vmatprep.subr.mxu0 0.0
    %1329 = vmatpush2.msra.mxu0 0.0
    %1330 = vmatprep.subr.mxu0 0.0
    %1331 = vmatpush2.msra.mxu0 0.0
    %1332 = vmatprep.subr.mxu0 0.0
    %1333 = vmatpush2.msra.mxu0 0.0
    %1334 = vmatprep.subr.mxu0 0.0
    %1335 = vmatpush2.msra.mxu0 0.0
    %1336 = vmatprep.subr.mxu0 0.0
    %1337 = vmatpush2.msra.mxu0 0.0
    %1338 = vmatprep.subr.mxu0 0.0
    %1339 = vmatpush2.msra.mxu0 0.0
    %1340 = vmatprep.subr.mxu0 0.0
    %1341 = vmatpush2.msra.mxu0 0.0
    %1342 = vmatprep.subr.mxu0 0.0
    %1343 = vmatpush2.msra.mxu0 0.0
    %1344 = vmatprep.subr.mxu0 0.0
    %1345 = vmatpush2.msra.mxu0 0.0
    %1346 = vmatprep.subr.mxu0 0.0
    %1347 = vmatpush2.msra.mxu0 0.0
    %1348 = vmatprep.subr.mxu0 0.0
    %1349 = vmatpush2.msra.mxu0 0.0
    %1350 = vmatprep.subr.mxu0 0.0
    %1351 = vmatpush2.msra.mxu0 0.0
    %1352 = vmatprep.subr.mxu0 0.0
    %1353 = vmatpush2.msra.mxu0 0.0
    %1354 = vmatprep.subr.mxu0 0.0
    %1355 = vmatpush2.msra.mxu0 0.0
    %1356 = vmatprep.subr.mxu0 0.0
    %1357 = vmatpush2.msra.mxu0 0.0
    %1358 = vmatprep.mubr.f32.mxu0 0.0
    %1359 = vmatmul.mubr.f32.gmra.mxu0 %v1292
    %v1360 = vpop.f32.mrf.mxu0
    %v1361 = vadd.f32 %v412, %v1360
    %v1362 = vpop.f32.mrf.mxu0
    %1363 = vdwg.mxu0
    %v1365 = vsel %vm414, %v43, 0
    %1367 = vmatprep.subr.mxu0 0.0
    %1368 = vmatpush1.msra.mxu0 0.0
    %1369 = vmatprep.subr.mxu0 0.0
    %1370 = vmatpush1.msra.mxu0 0.0
    %1371 = vmatprep.subr.mxu0 0.0
    %1372 = vmatpush1.msra.mxu0 0.0
    %1373 = vmatprep.subr.mxu0 0.0
    %1374 = vmatpush1.msra.mxu0 0.0
    %1375 = vmatprep.subr.mxu0 0.0
    %1376 = vmatpush1.msra.mxu0 0.0
    %1377 = vmatprep.subr.mxu0 0.0
    %1378 = vmatpush1.msra.mxu0 0.0
    %1379 = vmatprep.subr.mxu0 0.0
    %1380 = vmatpush1.msra.mxu0 0.0
    %1381 = vmatprep.subr.mxu0 0.0
    %1382 = vmatpush1.msra.mxu0 0.0
    %1383 = vmatprep.subr.mxu0 0.0
    %1384 = vmatpush1.msra.mxu0 0.0
    %1385 = vmatprep.subr.mxu0 0.0
    %1386 = vmatpush1.msra.mxu0 0.0
    %1387 = vmatprep.subr.mxu0 0.0
    %1388 = vmatpush1.msra.mxu0 0.0
    %1389 = vmatprep.subr.mxu0 0.0
    %1390 = vmatpush1.msra.mxu0 0.0
    %1391 = vmatprep.subr.mxu0 0.0
    %1392 = vmatpush1.msra.mxu0 0.0
    %1393 = vmatprep.subr.mxu0 0.0
    %1394 = vmatpush1.msra.mxu0 0.0
    %1395 = vmatprep.subr.mxu0 0.0
    %1396 = vmatpush1.msra.mxu0 0.0
    %1397 = vmatprep.subr.mxu0 0.0
    %1398 = vmatpush1.msra.mxu0 %v394
    %1399 = vmatprep.subr.mxu0 0.0
    %1400 = vmatpush2.msra.mxu0 0.0
    %1401 = vmatprep.subr.mxu0 0.0
    %1402 = vmatpush2.msra.mxu0 0.0
    %1403 = vmatprep.subr.mxu0 0.0
    %1404 = vmatpush2.msra.mxu0 0.0
    %1405 = vmatprep.subr.mxu0 0.0
    %1406 = vmatpush2.msra.mxu0 0.0
    %1407 = vmatprep.subr.mxu0 0.0
    %1408 = vmatpush2.msra.mxu0 0.0
    %1409 = vmatprep.subr.mxu0 0.0
    %1410 = vmatpush2.msra.mxu0 0.0
    %1411 = vmatprep.subr.mxu0 0.0
    %1412 = vmatpush2.msra.mxu0 0.0
    %1413 = vmatprep.subr.mxu0 0.0
    %1414 = vmatpush2.msra.mxu0 0.0
    %1415 = vmatprep.subr.mxu0 0.0
    %1416 = vmatpush2.msra.mxu0 0.0
    %1417 = vmatprep.subr.mxu0 0.0
    %1418 = vmatpush2.msra.mxu0 0.0
    %1419 = vmatprep.subr.mxu0 0.0
    %1420 = vmatpush2.msra.mxu0 0.0
    %1421 = vmatprep.subr.mxu0 0.0
    %1422 = vmatpush2.msra.mxu0 0.0
    %1423 = vmatprep.subr.mxu0 0.0
    %1424 = vmatpush2.msra.mxu0 0.0
    %1425 = vmatprep.subr.mxu0 0.0
    %1426 = vmatpush2.msra.mxu0 0.0
    %1427 = vmatprep.subr.mxu0 0.0
    %1428 = vmatpush2.msra.mxu0 0.0
    %1429 = vmatprep.subr.mxu0 0.0
    %1430 = vmatpush2.msra.mxu0 0.0
    %1431 = vmatprep.mubr.f32.mxu0 0.0
    %1432 = vmatmul.mubr.f32.gmra.mxu0 %v1365
    %v1433 = vpop.f32.mrf.mxu0
    %v1434 = vadd.f32 %v412, %v1433
    %v1435 = vpop.f32.mrf.mxu0
    %1436 = vdwg.mxu0
    %v1438 = vsel %vm414, %v44, 0
    %1440 = vmatprep.subr.mxu0 0.0
    %1441 = vmatpush1.msra.mxu0 0.0
    %1442 = vmatprep.subr.mxu0 0.0
    %1443 = vmatpush1.msra.mxu0 0.0
    %1444 = vmatprep.subr.mxu0 0.0
    %1445 = vmatpush1.msra.mxu0 0.0
    %1446 = vmatprep.subr.mxu0 0.0
    %1447 = vmatpush1.msra.mxu0 0.0
    %1448 = vmatprep.subr.mxu0 0.0
    %1449 = vmatpush1.msra.mxu0 0.0
    %1450 = vmatprep.subr.mxu0 0.0
    %1451 = vmatpush1.msra.mxu0 0.0
    %1452 = vmatprep.subr.mxu0 0.0
    %1453 = vmatpush1.msra.mxu0 0.0
    %1454 = vmatprep.subr.mxu0 0.0
    %1455 = vmatpush1.msra.mxu0 0.0
    %1456 = vmatprep.subr.mxu0 0.0
    %1457 = vmatpush1.msra.mxu0 0.0
    %1458 = vmatprep.subr.mxu0 0.0
    %1459 = vmatpush1.msra.mxu0 0.0
    %1460 = vmatprep.subr.mxu0 0.0
    %1461 = vmatpush1.msra.mxu0 0.0
    %1462 = vmatprep.subr.mxu0 0.0
    %1463 = vmatpush1.msra.mxu0 0.0
    %1464 = vmatprep.subr.mxu0 0.0
    %1465 = vmatpush1.msra.mxu0 0.0
    %1466 = vmatprep.subr.mxu0 0.0
    %1467 = vmatpush1.msra.mxu0 0.0
    %1468 = vmatprep.subr.mxu0 0.0
    %1469 = vmatpush1.msra.mxu0 0.0
    %1470 = vmatprep.subr.mxu0 0.0
    %1471 = vmatpush1.msra.mxu0 %v399
    %1472 = vmatprep.subr.mxu0 0.0
    %1473 = vmatpush2.msra.mxu0 0.0
    %1474 = vmatprep.subr.mxu0 0.0
    %1475 = vmatpush2.msra.mxu0 0.0
    %1476 = vmatprep.subr.mxu0 0.0
    %1477 = vmatpush2.msra.mxu0 0.0
    %1478 = vmatprep.subr.mxu0 0.0
    %1479 = vmatpush2.msra.mxu0 0.0
    %1480 = vmatprep.subr.mxu0 0.0
    %1481 = vmatpush2.msra.mxu0 0.0
    %1482 = vmatprep.subr.mxu0 0.0
    %1483 = vmatpush2.msra.mxu0 0.0
    %1484 = vmatprep.subr.mxu0 0.0
    %1485 = vmatpush2.msra.mxu0 0.0
    %1486 = vmatprep.subr.mxu0 0.0
    %1487 = vmatpush2.msra.mxu0 0.0
    %1488 = vmatprep.subr.mxu0 0.0
    %1489 = vmatpush2.msra.mxu0 0.0
    %1490 = vmatprep.subr.mxu0 0.0
    %1491 = vmatpush2.msra.mxu0 0.0
    %1492 = vmatprep.subr.mxu0 0.0
    %1493 = vmatpush2.msra.mxu0 0.0
    %1494 = vmatprep.subr.mxu0 0.0
    %1495 = vmatpush2.msra.mxu0 0.0
    %1496 = vmatprep.subr.mxu0 0.0
    %1497 = vmatpush2.msra.mxu0 0.0
    %1498 = vmatprep.subr.mxu0 0.0
    %1499 = vmatpush2.msra.mxu0 0.0
    %1500 = vmatprep.subr.mxu0 0.0
    %1501 = vmatpush2.msra.mxu0 0.0
    %1502 = vmatprep.subr.mxu0 0.0
    %1503 = vmatpush2.msra.mxu0 0.0
    %1504 = vmatprep.mubr.f32.mxu0 0.0
    %1505 = vmatmul.mubr.f32.gmra.mxu0 %v1438
    %v1506 = vpop.f32.mrf.mxu0
    %v1507 = vadd.f32 %v412, %v1506
    %v1508 = vpop.f32.mrf.mxu0
    %1509 = vdwg.mxu0
    %v1511 = vsel %vm414, %v45, 0
    %1513 = vmatprep.subr.mxu0 0.0
    %1514 = vmatpush1.msra.mxu0 0.0
    %1515 = vmatprep.subr.mxu0 0.0
    %1516 = vmatpush1.msra.mxu0 0.0
    %1517 = vmatprep.subr.mxu0 0.0
    %1518 = vmatpush1.msra.mxu0 0.0
    %1519 = vmatprep.subr.mxu0 0.0
    %1520 = vmatpush1.msra.mxu0 0.0
    %1521 = vmatprep.subr.mxu0 0.0
    %1522 = vmatpush1.msra.mxu0 0.0
    %1523 = vmatprep.subr.mxu0 0.0
    %1524 = vmatpush1.msra.mxu0 0.0
    %1525 = vmatprep.subr.mxu0 0.0
    %1526 = vmatpush1.msra.mxu0 0.0
    %1527 = vmatprep.subr.mxu0 0.0
    %1528 = vmatpush1.msra.mxu0 0.0
    %1529 = vmatprep.subr.mxu0 0.0
    %1530 = vmatpush1.msra.mxu0 0.0
    %1531 = vmatprep.subr.mxu0 0.0
    %1532 = vmatpush1.msra.mxu0 0.0
    %1533 = vmatprep.subr.mxu0 0.0
    %1534 = vmatpush1.msra.mxu0 0.0
    %1535 = vmatprep.subr.mxu0 0.0
    %1536 = vmatpush1.msra.mxu0 0.0
    %1537 = vmatprep.subr.mxu0 0.0
    %1538 = vmatpush1.msra.mxu0 0.0
    %1539 = vmatprep.subr.mxu0 0.0
    %1540 = vmatpush1.msra.mxu0 0.0
    %1541 = vmatprep.subr.mxu0 0.0
    %1542 = vmatpush1.msra.mxu0 0.0
    %1543 = vmatprep.subr.mxu0 0.0
    %1544 = vmatpush1.msra.mxu0 %v404
    %1545 = vmatprep.subr.mxu0 0.0
    %1546 = vmatpush2.msra.mxu0 0.0
    %1547 = vmatprep.subr.mxu0 0.0
    %1548 = vmatpush2.msra.mxu0 0.0
    %1549 = vmatprep.subr.mxu0 0.0
    %1550 = vmatpush2.msra.mxu0 0.0
    %1551 = vmatprep.subr.mxu0 0.0
    %1552 = vmatpush2.msra.mxu0 0.0
    %1553 = vmatprep.subr.mxu0 0.0
    %1554 = vmatpush2.msra.mxu0 0.0
    %1555 = vmatprep.subr.mxu0 0.0
    %1556 = vmatpush2.msra.mxu0 0.0
    %1557 = vmatprep.subr.mxu0 0.0
    %1558 = vmatpush2.msra.mxu0 0.0
    %1559 = vmatprep.subr.mxu0 0.0
    %1560 = vmatpush2.msra.mxu0 0.0
    %1561 = vmatprep.subr.mxu0 0.0
    %1562 = vmatpush2.msra.mxu0 0.0
    %1563 = vmatprep.subr.mxu0 0.0
    %1564 = vmatpush2.msra.mxu0 0.0
    %1565 = vmatprep.subr.mxu0 0.0
    %1566 = vmatpush2.msra.mxu0 0.0
    %1567 = vmatprep.subr.mxu0 0.0
    %1568 = vmatpush2.msra.mxu0 0.0
    %1569 = vmatprep.subr.mxu0 0.0
    %1570 = vmatpush2.msra.mxu0 0.0
    %1571 = vmatprep.subr.mxu0 0.0
    %1572 = vmatpush2.msra.mxu0 0.0
    %1573 = vmatprep.subr.mxu0 0.0
    %1574 = vmatpush2.msra.mxu0 0.0
    %1575 = vmatprep.subr.mxu0 0.0
    %1576 = vmatpush2.msra.mxu0 0.0
    %1577 = vmatprep.mubr.f32.mxu0 0.0
    %1578 = vmatmul.mubr.f32.gmra.mxu0 %v1511
    %v1579 = vpop.f32.mrf.mxu0
    %v1580 = vadd.f32 %v412, %v1579
    %v1581 = vpop.f32.mrf.mxu0
    %1582 = vdwg.mxu0
    %v1583 = vtanh.pop %v485
    %v1584 = vtanh.pop %v558
    %v1585 = vtanh.pop %v631
    %v1586 = vtanh.pop %v704
    %v1587 = vtanh.pop %v777
    %v1588 = vtanh.pop %v850
    %v1589 = vtanh.pop %v923
    %v1590 = vtanh.pop %v996
    %v1591 = vtanh.pop %v1069
    %v1592 = vtanh.pop %v1142
    %v1593 = vtanh.pop %v1215
    %v1594 = vtanh.pop %v1288
    %v1595 = vtanh.pop %v1361
    %v1596 = vtanh.pop %v1434
    %v1597 = vtanh.pop %v1507
    %v1598 = vtanh.pop %v1580
    %v1599 = vld [vmem:[%s6] sm:$0xff]
    %v1600 = vld [vmem:[%s6 + $0x8] sm:$0xff]
    %v1601 = vld [vmem:[%s6 + $0x10] sm:$0xff]
    %v1602 = vld [vmem:[%s6 + $0x18] sm:$0xff]
    %v1603 = vld [vmem:[%s6 + $0x20] sm:$0xff]
    %v1604 = vld [vmem:[%s6 + $0x28] sm:$0xff]
    %v1605 = vld [vmem:[%s6 + $0x30] sm:$0xff]
    %v1606 = vld [vmem:[%s6 + $0x38] sm:$0xff]
    %v1607 = vld [vmem:[%s6 + $0x40] sm:$0xff]
    %v1608 = vld [vmem:[%s6 + $0x48] sm:$0xff]
    %v1609 = vld [vmem:[%s6 + $0x50] sm:$0xff]
    %v1610 = vld [vmem:[%s6 + $0x58] sm:$0xff]
    %v1611 = vld [vmem:[%s6 + $0x60] sm:$0xff]
    %v1612 = vld [vmem:[%s6 + $0x68] sm:$0xff]
    %v1613 = vld [vmem:[%s6 + $0x70] sm:$0xff]
    %v1614 = vld [vmem:[%s6 + $0x78] sm:$0xff]
    %1615 = vmatprep.subr.mxu0 0.0
    %1616 = vmatpush1.msra.mxu0 %v1614
    %1617 = vmatprep.subr.mxu0 0.0
    %1618 = vmatpush1.msra.mxu0 %v1613
    %1619 = vmatprep.subr.mxu0 0.0
    %1620 = vmatpush1.msra.mxu0 %v1612
    %1621 = vmatprep.subr.mxu0 0.0
    %1622 = vmatpush1.msra.mxu0 %v1611
    %1623 = vmatprep.subr.mxu0 0.0
    %1624 = vmatpush1.msra.mxu0 %v1610
    %1625 = vmatprep.subr.mxu0 0.0
    %1626 = vmatpush1.msra.mxu0 %v1609
    %1627 = vmatprep.subr.mxu0 0.0
    %1628 = vmatpush1.msra.mxu0 %v1608
    %1629 = vmatprep.subr.mxu0 0.0
    %1630 = vmatpush1.msra.mxu0 %v1607
    %1631 = vmatprep.subr.mxu0 0.0
    %1632 = vmatpush1.msra.mxu0 %v1606
    %1633 = vmatprep.subr.mxu0 0.0
    %1634 = vmatpush1.msra.mxu0 %v1605
    %1635 = vmatprep.subr.mxu0 0.0
    %1636 = vmatpush1.msra.mxu0 %v1604
    %1637 = vmatprep.subr.mxu0 0.0
    %1638 = vmatpush1.msra.mxu0 %v1603
    %1639 = vmatprep.subr.mxu0 0.0
    %1640 = vmatpush1.msra.mxu0 %v1602
    %1641 = vmatprep.subr.mxu0 0.0
    %1642 = vmatpush1.msra.mxu0 %v1601
    %1643 = vmatprep.subr.mxu0 0.0
    %1644 = vmatpush1.msra.mxu0 %v1600
    %1645 = vmatprep.subr.mxu0 0.0
    %1646 = vmatpush1.msra.mxu0 %v1599
    %1647 = vmatprep.subr.mxu0 0.0
    %1648 = vmatpush2.msra.mxu0 0.0
    %1649 = vmatprep.subr.mxu0 0.0
    %1650 = vmatpush2.msra.mxu0 0.0
    %1651 = vmatprep.subr.mxu0 0.0
    %1652 = vmatpush2.msra.mxu0 0.0
    %1653 = vmatprep.subr.mxu0 0.0
    %1654 = vmatpush2.msra.mxu0 0.0
    %1655 = vmatprep.subr.mxu0 0.0
    %1656 = vmatpush2.msra.mxu0 0.0
    %1657 = vmatprep.subr.mxu0 0.0
    %1658 = vmatpush2.msra.mxu0 0.0
    %1659 = vmatprep.subr.mxu0 0.0
    %1660 = vmatpush2.msra.mxu0 0.0
    %1661 = vmatprep.subr.mxu0 0.0
    %1662 = vmatpush2.msra.mxu0 0.0
    %1663 = vmatprep.subr.mxu0 0.0
    %1664 = vmatpush2.msra.mxu0 0.0
    %1665 = vmatprep.subr.mxu0 0.0
    %1666 = vmatpush2.msra.mxu0 0.0
    %1667 = vmatprep.subr.mxu0 0.0
    %1668 = vmatpush2.msra.mxu0 0.0
    %1669 = vmatprep.subr.mxu0 0.0
    %1670 = vmatpush2.msra.mxu0 0.0
    %1671 = vmatprep.subr.mxu0 0.0
    %1672 = vmatpush2.msra.mxu0 0.0
    %1673 = vmatprep.subr.mxu0 0.0
    %1674 = vmatpush2.msra.mxu0 0.0
    %1675 = vmatprep.subr.mxu0 0.0
    %1676 = vmatpush2.msra.mxu0 0.0
    %1677 = vmatprep.subr.mxu0 0.0
    %1678 = vmatpush2.msra.mxu0 0.0
    %1679 = vmatprep.mubr.f32.mxu0 0.0
    %1680 = vmatmul.mubr.f32.gmra.mxu0 %v1583
    %v1681 = vpop.f32.mrf.mxu0
    %v1682 = vadd.f32 0.0, %v1681
    %v1683 = vpop.f32.mrf.mxu0
    %1684 = vmatprep.mubr.f32.mxu0 0.0
    %1685 = vmatmul.mubr.f32.gmra.mxu0 %v1584
    %v1686 = vpop.f32.mrf.mxu0
    %v1687 = vadd.f32 0.0, %v1686
    %v1688 = vpop.f32.mrf.mxu0
    %1689 = vmatprep.mubr.f32.mxu0 0.0
    %1690 = vmatmul.mubr.f32.gmra.mxu0 %v1585
    %v1691 = vpop.f32.mrf.mxu0
    %v1692 = vadd.f32 0.0, %v1691
    %v1693 = vpop.f32.mrf.mxu0
    %1694 = vmatprep.mubr.f32.mxu0 0.0
    %1695 = vmatmul.mubr.f32.gmra.mxu0 %v1586
    %v1696 = vpop.f32.mrf.mxu0
    %v1697 = vadd.f32 0.0, %v1696
    %v1698 = vpop.f32.mrf.mxu0
    %1699 = vmatprep.mubr.f32.mxu0 0.0
    %1700 = vmatmul.mubr.f32.gmra.mxu0 %v1587
    %v1701 = vpop.f32.mrf.mxu0
    %v1702 = vadd.f32 0.0, %v1701
    %v1703 = vpop.f32.mrf.mxu0
    %1704 = vmatprep.mubr.f32.mxu0 0.0
    %1705 = vmatmul.mubr.f32.gmra.mxu0 %v1588
    %v1706 = vpop.f32.mrf.mxu0
    %v1707 = vadd.f32 0.0, %v1706
    %v1708 = vpop.f32.mrf.mxu0
    %1709 = vmatprep.mubr.f32.mxu0 0.0
    %1710 = vmatmul.mubr.f32.gmra.mxu0 %v1589
    %v1711 = vpop.f32.mrf.mxu0
    %v1712 = vadd.f32 0.0, %v1711
    %v1713 = vpop.f32.mrf.mxu0
    %1714 = vmatprep.mubr.f32.mxu0 0.0
    %1715 = vmatmul.mubr.f32.gmra.mxu0 %v1590
    %v1716 = vpop.f32.mrf.mxu0
    %v1717 = vadd.f32 0.0, %v1716
    %v1718 = vpop.f32.mrf.mxu0
    %1719 = vmatprep.mubr.f32.mxu0 0.0
    %1720 = vmatmul.mubr.f32.gmra.mxu0 %v1591
    %v1721 = vpop.f32.mrf.mxu0
    %v1722 = vadd.f32 0.0, %v1721
    %v1723 = vpop.f32.mrf.mxu0
    %1724 = vmatprep.mubr.f32.mxu0 0.0
    %1725 = vmatmul.mubr.f32.gmra.mxu0 %v1592
    %v1726 = vpop.f32.mrf.mxu0
    %v1727 = vadd.f32 0.0, %v1726
    %v1728 = vpop.f32.mrf.mxu0
    %1729 = vmatprep.mubr.f32.mxu0 0.0
    %1730 = vmatmul.mubr.f32.gmra.mxu0 %v1593
    %v1731 = vpop.f32.mrf.mxu0
    %v1732 = vadd.f32 0.0, %v1731
    %v1733 = vpop.f32.mrf.mxu0
    %1734 = vmatprep.mubr.f32.mxu0 0.0
    %1735 = vmatmul.mubr.f32.gmra.mxu0 %v1594
    %v1736 = vpop.f32.mrf.mxu0
    %v1737 = vadd.f32 0.0, %v1736
    %v1738 = vpop.f32.mrf.mxu0
    %1739 = vmatprep.mubr.f32.mxu0 0.0
    %1740 = vmatmul.mubr.f32.gmra.mxu0 %v1595
    %v1741 = vpop.f32.mrf.mxu0
    %v1742 = vadd.f32 0.0, %v1741
    %v1743 = vpop.f32.mrf.mxu0
    %1744 = vmatprep.mubr.f32.mxu0 0.0
    %1745 = vmatmul.mubr.f32.gmra.mxu0 %v1596
    %v1746 = vpop.f32.mrf.mxu0
    %v1747 = vadd.f32 0.0, %v1746
    %v1748 = vpop.f32.mrf.mxu0
    %1749 = vmatprep.mubr.f32.mxu0 0.0
    %1750 = vmatmul.mubr.f32.gmra.mxu0 %v1597
    %v1751 = vpop.f32.mrf.mxu0
    %v1752 = vadd.f32 0.0, %v1751
    %v1753 = vpop.f32.mrf.mxu0
    %1754 = vmatprep.mubr.f32.mxu0 0.0
    %1755 = vmatmul.mubr.f32.gmra.mxu0 %v1598
    %v1756 = vpop.f32.mrf.mxu0
    %v1757 = vadd.f32 0.0, %v1756
    %v1758 = vpop.f32.mrf.mxu0
    %1759 = vdwg.mxu0
    %v1760 = vld [vmem:[%s7] sm:$0x1]
    %v1762 = vlaneseq
    %v1763 = vshrl.u32 %v1762, 7
    %v1764 = vsub.s32 0, %v1763
    %v1765 = vrot.slane %v1760, %v1764
    %1767 = vmatprep.subr.mxu0 0.0
    %1768 = vmatpush1.msra.mxu0 0.0
    %1769 = vmatprep.subr.mxu0 0.0
    %1770 = vmatpush1.msra.mxu0 0.0
    %1771 = vmatprep.subr.mxu0 0.0
    %1772 = vmatpush1.msra.mxu0 0.0
    %1773 = vmatprep.subr.mxu0 0.0
    %1774 = vmatpush1.msra.mxu0 0.0
    %1775 = vmatprep.subr.mxu0 0.0
    %1776 = vmatpush1.msra.mxu0 0.0
    %1777 = vmatprep.subr.mxu0 0.0
    %1778 = vmatpush1.msra.mxu0 0.0
    %1779 = vmatprep.subr.mxu0 0.0
    %1780 = vmatpush1.msra.mxu0 0.0
    %1781 = vmatprep.subr.mxu0 0.0
    %1782 = vmatpush1.msra.mxu0 0.0
    %1783 = vmatprep.subr.mxu0 0.0
    %1784 = vmatpush1.msra.mxu0 0.0
    %1785 = vmatprep.subr.mxu0 0.0
    %1786 = vmatpush1.msra.mxu0 0.0
    %1787 = vmatprep.subr.mxu0 0.0
    %1788 = vmatpush1.msra.mxu0 0.0
    %1789 = vmatprep.subr.mxu0 0.0
    %1790 = vmatpush1.msra.mxu0 0.0
    %1791 = vmatprep.subr.mxu0 0.0
    %1792 = vmatpush1.msra.mxu0 0.0
    %1793 = vmatprep.subr.mxu0 0.0
    %1794 = vmatpush1.msra.mxu0 0.0
    %1795 = vmatprep.subr.mxu0 0.0
    %1796 = vmatpush1.msra.mxu0 0.0
    %1797 = vmatprep.subr.mxu0 0.0
    %1798 = vmatpush1.msra.mxu0 %v1682
    %1799 = vmatprep.subr.mxu0 0.0
    %1800 = vmatpush2.msra.mxu0 0.0
    %1801 = vmatprep.subr.mxu0 0.0
    %1802 = vmatpush2.msra.mxu0 0.0
    %1803 = vmatprep.subr.mxu0 0.0
    %1804 = vmatpush2.msra.mxu0 0.0
    %1805 = vmatprep.subr.mxu0 0.0
    %1806 = vmatpush2.msra.mxu0 0.0
    %1807 = vmatprep.subr.mxu0 0.0
    %1808 = vmatpush2.msra.mxu0 0.0
    %1809 = vmatprep.subr.mxu0 0.0
    %1810 = vmatpush2.msra.mxu0 0.0
    %1811 = vmatprep.subr.mxu0 0.0
    %1812 = vmatpush2.msra.mxu0 0.0
    %1813 = vmatprep.subr.mxu0 0.0
    %1814 = vmatpush2.msra.mxu0 0.0
    %1815 = vmatprep.subr.mxu0 0.0
    %1816 = vmatpush2.msra.mxu0 0.0
    %1817 = vmatprep.subr.mxu0 0.0
    %1818 = vmatpush2.msra.mxu0 0.0
    %1819 = vmatprep.subr.mxu0 0.0
    %1820 = vmatpush2.msra.mxu0 0.0
    %1821 = vmatprep.subr.mxu0 0.0
    %1822 = vmatpush2.msra.mxu0 0.0
    %1823 = vmatprep.subr.mxu0 0.0
    %1824 = vmatpush2.msra.mxu0 0.0
    %1825 = vmatprep.subr.mxu0 0.0
    %1826 = vmatpush2.msra.mxu0 0.0
    %1827 = vmatprep.subr.mxu0 0.0
    %1828 = vmatpush2.msra.mxu0 0.0
    %1829 = vmatprep.subr.mxu0 0.0
    %1830 = vmatpush2.msra.mxu0 0.0
    %1831 = vmatprep.mubr.f32.mxu0 0.0
    %1832 = vmatmul.mubr.f32.gmra.mxu0 %v416
    %v1833 = vpop.f32.mrf.mxu0
    %v1834 = vadd.f32 %v1765, %v1833
    %v1835 = vpop.f32.mrf.mxu0
    %1836 = vdwg.mxu0
    %1837 = vmatprep.subr.mxu0 0.0
    %1838 = vmatpush1.msra.mxu0 0.0
    %1839 = vmatprep.subr.mxu0 0.0
    %1840 = vmatpush1.msra.mxu0 0.0
    %1841 = vmatprep.subr.mxu0 0.0
    %1842 = vmatpush1.msra.mxu0 0.0
    %1843 = vmatprep.subr.mxu0 0.0
    %1844 = vmatpush1.msra.mxu0 0.0
    %1845 = vmatprep.subr.mxu0 0.0
    %1846 = vmatpush1.msra.mxu0 0.0
    %1847 = vmatprep.subr.mxu0 0.0
    %1848 = vmatpush1.msra.mxu0 0.0
    %1849 = vmatprep.subr.mxu0 0.0
    %1850 = vmatpush1.msra.mxu0 0.0
    %1851 = vmatprep.subr.mxu0 0.0
    %1852 = vmatpush1.msra.mxu0 0.0
    %1853 = vmatprep.subr.mxu0 0.0
    %1854 = vmatpush1.msra.mxu0 0.0
    %1855 = vmatprep.subr.mxu0 0.0
    %1856 = vmatpush1.msra.mxu0 0.0
    %1857 = vmatprep.subr.mxu0 0.0
    %1858 = vmatpush1.msra.mxu0 0.0
    %1859 = vmatprep.subr.mxu0 0.0
    %1860 = vmatpush1.msra.mxu0 0.0
    %1861 = vmatprep.subr.mxu0 0.0
    %1862 = vmatpush1.msra.mxu0 0.0
    %1863 = vmatprep.subr.mxu0 0.0
    %1864 = vmatpush1.msra.mxu0 0.0
    %1865 = vmatprep.subr.mxu0 0.0
    %1866 = vmatpush1.msra.mxu0 0.0
    %1867 = vmatprep.subr.mxu0 0.0
    %1868 = vmatpush1.msra.mxu0 %v1687
    %1869 = vmatprep.subr.mxu0 0.0
    %1870 = vmatpush2.msra.mxu0 0.0
    %1871 = vmatprep.subr.mxu0 0.0
    %1872 = vmatpush2.msra.mxu0 0.0
    %1873 = vmatprep.subr.mxu0 0.0
    %1874 = vmatpush2.msra.mxu0 0.0
    %1875 = vmatprep.subr.mxu0 0.0
    %1876 = vmatpush2.msra.mxu0 0.0
    %1877 = vmatprep.subr.mxu0 0.0
    %1878 = vmatpush2.msra.mxu0 0.0
    %1879 = vmatprep.subr.mxu0 0.0
    %1880 = vmatpush2.msra.mxu0 0.0
    %1881 = vmatprep.subr.mxu0 0.0
    %1882 = vmatpush2.msra.mxu0 0.0
    %1883 = vmatprep.subr.mxu0 0.0
    %1884 = vmatpush2.msra.mxu0 0.0
    %1885 = vmatprep.subr.mxu0 0.0
    %1886 = vmatpush2.msra.mxu0 0.0
    %1887 = vmatprep.subr.mxu0 0.0
    %1888 = vmatpush2.msra.mxu0 0.0
    %1889 = vmatprep.subr.mxu0 0.0
    %1890 = vmatpush2.msra.mxu0 0.0
    %1891 = vmatprep.subr.mxu0 0.0
    %1892 = vmatpush2.msra.mxu0 0.0
    %1893 = vmatprep.subr.mxu0 0.0
    %1894 = vmatpush2.msra.mxu0 0.0
    %1895 = vmatprep.subr.mxu0 0.0
    %1896 = vmatpush2.msra.mxu0 0.0
    %1897 = vmatprep.subr.mxu0 0.0
    %1898 = vmatpush2.msra.mxu0 0.0
    %1899 = vmatprep.subr.mxu0 0.0
    %1900 = vmatpush2.msra.mxu0 0.0
    %1901 = vmatprep.mubr.f32.mxu0 0.0
    %1902 = vmatmul.mubr.f32.gmra.mxu0 %v489
    %v1903 = vpop.f32.mrf.mxu0
    %v1904 = vadd.f32 %v1765, %v1903
    %v1905 = vpop.f32.mrf.mxu0
    %1906 = vdwg.mxu0
    %1907 = vmatprep.subr.mxu0 0.0
    %1908 = vmatpush1.msra.mxu0 0.0
    %1909 = vmatprep.subr.mxu0 0.0
    %1910 = vmatpush1.msra.mxu0 0.0
    %1911 = vmatprep.subr.mxu0 0.0
    %1912 = vmatpush1.msra.mxu0 0.0
    %1913 = vmatprep.subr.mxu0 0.0
    %1914 = vmatpush1.msra.mxu0 0.0
    %1915 = vmatprep.subr.mxu0 0.0
    %1916 = vmatpush1.msra.mxu0 0.0
    %1917 = vmatprep.subr.mxu0 0.0
    %1918 = vmatpush1.msra.mxu0 0.0
    %1919 = vmatprep.subr.mxu0 0.0
    %1920 = vmatpush1.msra.mxu0 0.0
    %1921 = vmatprep.subr.mxu0 0.0
    %1922 = vmatpush1.msra.mxu0 0.0
    %1923 = vmatprep.subr.mxu0 0.0
    %1924 = vmatpush1.msra.mxu0 0.0
    %1925 = vmatprep.subr.mxu0 0.0
    %1926 = vmatpush1.msra.mxu0 0.0
    %1927 = vmatprep.subr.mxu0 0.0
    %1928 = vmatpush1.msra.mxu0 0.0
    %1929 = vmatprep.subr.mxu0 0.0
    %1930 = vmatpush1.msra.mxu0 0.0
    %1931 = vmatprep.subr.mxu0 0.0
    %1932 = vmatpush1.msra.mxu0 0.0
    %1933 = vmatprep.subr.mxu0 0.0
    %1934 = vmatpush1.msra.mxu0 0.0
    %1935 = vmatprep.subr.mxu0 0.0
    %1936 = vmatpush1.msra.mxu0 0.0
    %1937 = vmatprep.subr.mxu0 0.0
    %1938 = vmatpush1.msra.mxu0 %v1692
    %1939 = vmatprep.subr.mxu0 0.0
    %1940 = vmatpush2.msra.mxu0 0.0
    %1941 = vmatprep.subr.mxu0 0.0
    %1942 = vmatpush2.msra.mxu0 0.0
    %1943 = vmatprep.subr.mxu0 0.0
    %1944 = vmatpush2.msra.mxu0 0.0
    %1945 = vmatprep.subr.mxu0 0.0
    %1946 = vmatpush2.msra.mxu0 0.0
    %1947 = vmatprep.subr.mxu0 0.0
    %1948 = vmatpush2.msra.mxu0 0.0
    %1949 = vmatprep.subr.mxu0 0.0
    %1950 = vmatpush2.msra.mxu0 0.0
    %1951 = vmatprep.subr.mxu0 0.0
    %1952 = vmatpush2.msra.mxu0 0.0
    %1953 = vmatprep.subr.mxu0 0.0
    %1954 = vmatpush2.msra.mxu0 0.0
    %1955 = vmatprep.subr.mxu0 0.0
    %1956 = vmatpush2.msra.mxu0 0.0
    %1957 = vmatprep.subr.mxu0 0.0
    %1958 = vmatpush2.msra.mxu0 0.0
    %1959 = vmatprep.subr.mxu0 0.0
    %1960 = vmatpush2.msra.mxu0 0.0
    %1961 = vmatprep.subr.mxu0 0.0
    %1962 = vmatpush2.msra.mxu0 0.0
    %1963 = vmatprep.subr.mxu0 0.0
    %1964 = vmatpush2.msra.mxu0 0.0
    %1965 = vmatprep.subr.mxu0 0.0
    %1966 = vmatpush2.msra.mxu0 0.0
    %1967 = vmatprep.subr.mxu0 0.0
    %1968 = vmatpush2.msra.mxu0 0.0
    %1969 = vmatprep.subr.mxu0 0.0
    %1970 = vmatpush2.msra.mxu0 0.0
    %1971 = vmatprep.mubr.f32.mxu0 0.0
    %1972 = vmatmul.mubr.f32.gmra.mxu0 %v562
    %v1973 = vpop.f32.mrf.mxu0
    %v1974 = vadd.f32 %v1765, %v1973
    %v1975 = vpop.f32.mrf.mxu0
    %1976 = vdwg.mxu0
    %1977 = vmatprep.subr.mxu0 0.0
    %1978 = vmatpush1.msra.mxu0 0.0
    %1979 = vmatprep.subr.mxu0 0.0
    %1980 = vmatpush1.msra.mxu0 0.0
    %1981 = vmatprep.subr.mxu0 0.0
    %1982 = vmatpush1.msra.mxu0 0.0
    %1983 = vmatprep.subr.mxu0 0.0
    %1984 = vmatpush1.msra.mxu0 0.0
    %1985 = vmatprep.subr.mxu0 0.0
    %1986 = vmatpush1.msra.mxu0 0.0
    %1987 = vmatprep.subr.mxu0 0.0
    %1988 = vmatpush1.msra.mxu0 0.0
    %1989 = vmatprep.subr.mxu0 0.0
    %1990 = vmatpush1.msra.mxu0 0.0
    %1991 = vmatprep.subr.mxu0 0.0
    %1992 = vmatpush1.msra.mxu0 0.0
    %1993 = vmatprep.subr.mxu0 0.0
    %1994 = vmatpush1.msra.mxu0 0.0
    %1995 = vmatprep.subr.mxu0 0.0
    %1996 = vmatpush1.msra.mxu0 0.0
    %1997 = vmatprep.subr.mxu0 0.0
    %1998 = vmatpush1.msra.mxu0 0.0
    %1999 = vmatprep.subr.mxu0 0.0
    %2000 = vmatpush1.msra.mxu0 0.0
    %2001 = vmatprep.subr.mxu0 0.0
    %2002 = vmatpush1.msra.mxu0 0.0
    %2003 = vmatprep.subr.mxu0 0.0
    %2004 = vmatpush1.msra.mxu0 0.0
    %2005 = vmatprep.subr.mxu0 0.0
    %2006 = vmatpush1.msra.mxu0 0.0
    %2007 = vmatprep.subr.mxu0 0.0
    %2008 = vmatpush1.msra.mxu0 %v1697
    %2009 = vmatprep.subr.mxu0 0.0
    %2010 = vmatpush2.msra.mxu0 0.0
    %2011 = vmatprep.subr.mxu0 0.0
    %2012 = vmatpush2.msra.mxu0 0.0
    %2013 = vmatprep.subr.mxu0 0.0
    %2014 = vmatpush2.msra.mxu0 0.0
    %2015 = vmatprep.subr.mxu0 0.0
    %2016 = vmatpush2.msra.mxu0 0.0
    %2017 = vmatprep.subr.mxu0 0.0
    %2018 = vmatpush2.msra.mxu0 0.0
    %2019 = vmatprep.subr.mxu0 0.0
    %2020 = vmatpush2.msra.mxu0 0.0
    %2021 = vmatprep.subr.mxu0 0.0
    %2022 = vmatpush2.msra.mxu0 0.0
    %2023 = vmatprep.subr.mxu0 0.0
    %2024 = vmatpush2.msra.mxu0 0.0
    %2025 = vmatprep.subr.mxu0 0.0
    %2026 = vmatpush2.msra.mxu0 0.0
    %2027 = vmatprep.subr.mxu0 0.0
    %2028 = vmatpush2.msra.mxu0 0.0
    %2029 = vmatprep.subr.mxu0 0.0
    %2030 = vmatpush2.msra.mxu0 0.0
    %2031 = vmatprep.subr.mxu0 0.0
    %2032 = vmatpush2.msra.mxu0 0.0
    %2033 = vmatprep.subr.mxu0 0.0
    %2034 = vmatpush2.msra.mxu0 0.0
    %2035 = vmatprep.subr.mxu0 0.0
    %2036 = vmatpush2.msra.mxu0 0.0
    %2037 = vmatprep.subr.mxu0 0.0
    %2038 = vmatpush2.msra.mxu0 0.0
    %2039 = vmatprep.subr.mxu0 0.0
    %2040 = vmatpush2.msra.mxu0 0.0
    %2041 = vmatprep.mubr.f32.mxu0 0.0
    %2042 = vmatmul.mubr.f32.gmra.mxu0 %v635
    %v2043 = vpop.f32.mrf.mxu0
    %v2044 = vadd.f32 %v1765, %v2043
    %v2045 = vpop.f32.mrf.mxu0
    %2046 = vdwg.mxu0
    %2047 = vmatprep.subr.mxu0 0.0
    %2048 = vmatpush1.msra.mxu0 0.0
    %2049 = vmatprep.subr.mxu0 0.0
    %2050 = vmatpush1.msra.mxu0 0.0
    %2051 = vmatprep.subr.mxu0 0.0
    %2052 = vmatpush1.msra.mxu0 0.0
    %2053 = vmatprep.subr.mxu0 0.0
    %2054 = vmatpush1.msra.mxu0 0.0
    %2055 = vmatprep.subr.mxu0 0.0
    %2056 = vmatpush1.msra.mxu0 0.0
    %2057 = vmatprep.subr.mxu0 0.0
    %2058 = vmatpush1.msra.mxu0 0.0
    %2059 = vmatprep.subr.mxu0 0.0
    %2060 = vmatpush1.msra.mxu0 0.0
    %2061 = vmatprep.subr.mxu0 0.0
    %2062 = vmatpush1.msra.mxu0 0.0
    %2063 = vmatprep.subr.mxu0 0.0
    %2064 = vmatpush1.msra.mxu0 0.0
    %2065 = vmatprep.subr.mxu0 0.0
    %2066 = vmatpush1.msra.mxu0 0.0
    %2067 = vmatprep.subr.mxu0 0.0
    %2068 = vmatpush1.msra.mxu0 0.0
    %2069 = vmatprep.subr.mxu0 0.0
    %2070 = vmatpush1.msra.mxu0 0.0
    %2071 = vmatprep.subr.mxu0 0.0
    %2072 = vmatpush1.msra.mxu0 0.0
    %2073 = vmatprep.subr.mxu0 0.0
    %2074 = vmatpush1.msra.mxu0 0.0
    %2075 = vmatprep.subr.mxu0 0.0
    %2076 = vmatpush1.msra.mxu0 0.0
    %2077 = vmatprep.subr.mxu0 0.0
    %2078 = vmatpush1.msra.mxu0 %v1702
    %2079 = vmatprep.subr.mxu0 0.0
    %2080 = vmatpush2.msra.mxu0 0.0
    %2081 = vmatprep.subr.mxu0 0.0
    %2082 = vmatpush2.msra.mxu0 0.0
    %2083 = vmatprep.subr.mxu0 0.0
    %2084 = vmatpush2.msra.mxu0 0.0
    %2085 = vmatprep.subr.mxu0 0.0
    %2086 = vmatpush2.msra.mxu0 0.0
    %2087 = vmatprep.subr.mxu0 0.0
    %2088 = vmatpush2.msra.mxu0 0.0
    %2089 = vmatprep.subr.mxu0 0.0
    %2090 = vmatpush2.msra.mxu0 0.0
    %2091 = vmatprep.subr.mxu0 0.0
    %2092 = vmatpush2.msra.mxu0 0.0
    %2093 = vmatprep.subr.mxu0 0.0
    %2094 = vmatpush2.msra.mxu0 0.0
    %2095 = vmatprep.subr.mxu0 0.0
    %2096 = vmatpush2.msra.mxu0 0.0
    %2097 = vmatprep.subr.mxu0 0.0
    %2098 = vmatpush2.msra.mxu0 0.0
    %2099 = vmatprep.subr.mxu0 0.0
    %2100 = vmatpush2.msra.mxu0 0.0
    %2101 = vmatprep.subr.mxu0 0.0
    %2102 = vmatpush2.msra.mxu0 0.0
    %2103 = vmatprep.subr.mxu0 0.0
    %2104 = vmatpush2.msra.mxu0 0.0
    %2105 = vmatprep.subr.mxu0 0.0
    %2106 = vmatpush2.msra.mxu0 0.0
    %2107 = vmatprep.subr.mxu0 0.0
    %2108 = vmatpush2.msra.mxu0 0.0
    %2109 = vmatprep.subr.mxu0 0.0
    %2110 = vmatpush2.msra.mxu0 0.0
    %2111 = vmatprep.mubr.f32.mxu0 0.0
    %2112 = vmatmul.mubr.f32.gmra.mxu0 %v708
    %v2113 = vpop.f32.mrf.mxu0
    %v2114 = vadd.f32 %v1765, %v2113
    %v2115 = vpop.f32.mrf.mxu0
    %2116 = vdwg.mxu0
    %2117 = vmatprep.subr.mxu0 0.0
    %2118 = vmatpush1.msra.mxu0 0.0
    %2119 = vmatprep.subr.mxu0 0.0
    %2120 = vmatpush1.msra.mxu0 0.0
    %2121 = vmatprep.subr.mxu0 0.0
    %2122 = vmatpush1.msra.mxu0 0.0
    %2123 = vmatprep.subr.mxu0 0.0
    %2124 = vmatpush1.msra.mxu0 0.0
    %2125 = vmatprep.subr.mxu0 0.0
    %2126 = vmatpush1.msra.mxu0 0.0
    %2127 = vmatprep.subr.mxu0 0.0
    %2128 = vmatpush1.msra.mxu0 0.0
    %2129 = vmatprep.subr.mxu0 0.0
    %2130 = vmatpush1.msra.mxu0 0.0
    %2131 = vmatprep.subr.mxu0 0.0
    %2132 = vmatpush1.msra.mxu0 0.0
    %2133 = vmatprep.subr.mxu0 0.0
    %2134 = vmatpush1.msra.mxu0 0.0
    %2135 = vmatprep.subr.mxu0 0.0
    %2136 = vmatpush1.msra.mxu0 0.0
    %2137 = vmatprep.subr.mxu0 0.0
    %2138 = vmatpush1.msra.mxu0 0.0
    %2139 = vmatprep.subr.mxu0 0.0
    %2140 = vmatpush1.msra.mxu0 0.0
    %2141 = vmatprep.subr.mxu0 0.0
    %2142 = vmatpush1.msra.mxu0 0.0
    %2143 = vmatprep.subr.mxu0 0.0
    %2144 = vmatpush1.msra.mxu0 0.0
    %2145 = vmatprep.subr.mxu0 0.0
    %2146 = vmatpush1.msra.mxu0 0.0
    %2147 = vmatprep.subr.mxu0 0.0
    %2148 = vmatpush1.msra.mxu0 %v1707
    %2149 = vmatprep.subr.mxu0 0.0
    %2150 = vmatpush2.msra.mxu0 0.0
    %2151 = vmatprep.subr.mxu0 0.0
    %2152 = vmatpush2.msra.mxu0 0.0
    %2153 = vmatprep.subr.mxu0 0.0
    %2154 = vmatpush2.msra.mxu0 0.0
    %2155 = vmatprep.subr.mxu0 0.0
    %2156 = vmatpush2.msra.mxu0 0.0
    %2157 = vmatprep.subr.mxu0 0.0
    %2158 = vmatpush2.msra.mxu0 0.0
    %2159 = vmatprep.subr.mxu0 0.0
    %2160 = vmatpush2.msra.mxu0 0.0
    %2161 = vmatprep.subr.mxu0 0.0
    %2162 = vmatpush2.msra.mxu0 0.0
    %2163 = vmatprep.subr.mxu0 0.0
    %2164 = vmatpush2.msra.mxu0 0.0
    %2165 = vmatprep.subr.mxu0 0.0
    %2166 = vmatpush2.msra.mxu0 0.0
    %2167 = vmatprep.subr.mxu0 0.0
    %2168 = vmatpush2.msra.mxu0 0.0
    %2169 = vmatprep.subr.mxu0 0.0
    %2170 = vmatpush2.msra.mxu0 0.0
    %2171 = vmatprep.subr.mxu0 0.0
    %2172 = vmatpush2.msra.mxu0 0.0
    %2173 = vmatprep.subr.mxu0 0.0
    %2174 = vmatpush2.msra.mxu0 0.0
    %2175 = vmatprep.subr.mxu0 0.0
    %2176 = vmatpush2.msra.mxu0 0.0
    %2177 = vmatprep.subr.mxu0 0.0
    %2178 = vmatpush2.msra.mxu0 0.0
    %2179 = vmatprep.subr.mxu0 0.0
    %2180 = vmatpush2.msra.mxu0 0.0
    %2181 = vmatprep.mubr.f32.mxu0 0.0
    %2182 = vmatmul.mubr.f32.gmra.mxu0 %v781
    %v2183 = vpop.f32.mrf.mxu0
    %v2184 = vadd.f32 %v1765, %v2183
    %v2185 = vpop.f32.mrf.mxu0
    %2186 = vdwg.mxu0
    %2187 = vmatprep.subr.mxu0 0.0
    %2188 = vmatpush1.msra.mxu0 0.0
    %2189 = vmatprep.subr.mxu0 0.0
    %2190 = vmatpush1.msra.mxu0 0.0
    %2191 = vmatprep.subr.mxu0 0.0
    %2192 = vmatpush1.msra.mxu0 0.0
    %2193 = vmatprep.subr.mxu0 0.0
    %2194 = vmatpush1.msra.mxu0 0.0
    %2195 = vmatprep.subr.mxu0 0.0
    %2196 = vmatpush1.msra.mxu0 0.0
    %2197 = vmatprep.subr.mxu0 0.0
    %2198 = vmatpush1.msra.mxu0 0.0
    %2199 = vmatprep.subr.mxu0 0.0
    %2200 = vmatpush1.msra.mxu0 0.0
    %2201 = vmatprep.subr.mxu0 0.0
    %2202 = vmatpush1.msra.mxu0 0.0
    %2203 = vmatprep.subr.mxu0 0.0
    %2204 = vmatpush1.msra.mxu0 0.0
    %2205 = vmatprep.subr.mxu0 0.0
    %2206 = vmatpush1.msra.mxu0 0.0
    %2207 = vmatprep.subr.mxu0 0.0
    %2208 = vmatpush1.msra.mxu0 0.0
    %2209 = vmatprep.subr.mxu0 0.0
    %2210 = vmatpush1.msra.mxu0 0.0
    %2211 = vmatprep.subr.mxu0 0.0
    %2212 = vmatpush1.msra.mxu0 0.0
    %2213 = vmatprep.subr.mxu0 0.0
    %2214 = vmatpush1.msra.mxu0 0.0
    %2215 = vmatprep.subr.mxu0 0.0
    %2216 = vmatpush1.msra.mxu0 0.0
    %2217 = vmatprep.subr.mxu0 0.0
    %2218 = vmatpush1.msra.mxu0 %v1712
    %2219 = vmatprep.subr.mxu0 0.0
    %2220 = vmatpush2.msra.mxu0 0.0
    %2221 = vmatprep.subr.mxu0 0.0
    %2222 = vmatpush2.msra.mxu0 0.0
    %2223 = vmatprep.subr.mxu0 0.0
    %2224 = vmatpush2.msra.mxu0 0.0
    %2225 = vmatprep.subr.mxu0 0.0
    %2226 = vmatpush2.msra.mxu0 0.0
    %2227 = vmatprep.subr.mxu0 0.0
    %2228 = vmatpush2.msra.mxu0 0.0
    %2229 = vmatprep.subr.mxu0 0.0
    %2230 = vmatpush2.msra.mxu0 0.0
    %2231 = vmatprep.subr.mxu0 0.0
    %2232 = vmatpush2.msra.mxu0 0.0
    %2233 = vmatprep.subr.mxu0 0.0
    %2234 = vmatpush2.msra.mxu0 0.0
    %2235 = vmatprep.subr.mxu0 0.0
    %2236 = vmatpush2.msra.mxu0 0.0
    %2237 = vmatprep.subr.mxu0 0.0
    %2238 = vmatpush2.msra.mxu0 0.0
    %2239 = vmatprep.subr.mxu0 0.0
    %2240 = vmatpush2.msra.mxu0 0.0
    %2241 = vmatprep.subr.mxu0 0.0
    %2242 = vmatpush2.msra.mxu0 0.0
    %2243 = vmatprep.subr.mxu0 0.0
    %2244 = vmatpush2.msra.mxu0 0.0
    %2245 = vmatprep.subr.mxu0 0.0
    %2246 = vmatpush2.msra.mxu0 0.0
    %2247 = vmatprep.subr.mxu0 0.0
    %2248 = vmatpush2.msra.mxu0 0.0
    %2249 = vmatprep.subr.mxu0 0.0
    %2250 = vmatpush2.msra.mxu0 0.0
    %2251 = vmatprep.mubr.f32.mxu0 0.0
    %2252 = vmatmul.mubr.f32.gmra.mxu0 %v854
    %v2253 = vpop.f32.mrf.mxu0
    %v2254 = vadd.f32 %v1765, %v2253
    %v2255 = vpop.f32.mrf.mxu0
    %2256 = vdwg.mxu0
    %2257 = vmatprep.subr.mxu0 0.0
    %2258 = vmatpush1.msra.mxu0 0.0
    %2259 = vmatprep.subr.mxu0 0.0
    %2260 = vmatpush1.msra.mxu0 0.0
    %2261 = vmatprep.subr.mxu0 0.0
    %2262 = vmatpush1.msra.mxu0 0.0
    %2263 = vmatprep.subr.mxu0 0.0
    %2264 = vmatpush1.msra.mxu0 0.0
    %2265 = vmatprep.subr.mxu0 0.0
    %2266 = vmatpush1.msra.mxu0 0.0
    %2267 = vmatprep.subr.mxu0 0.0
    %2268 = vmatpush1.msra.mxu0 0.0
    %2269 = vmatprep.subr.mxu0 0.0
    %2270 = vmatpush1.msra.mxu0 0.0
    %2271 = vmatprep.subr.mxu0 0.0
    %2272 = vmatpush1.msra.mxu0 0.0
    %2273 = vmatprep.subr.mxu0 0.0
    %2274 = vmatpush1.msra.mxu0 0.0
    %2275 = vmatprep.subr.mxu0 0.0
    %2276 = vmatpush1.msra.mxu0 0.0
    %2277 = vmatprep.subr.mxu0 0.0
    %2278 = vmatpush1.msra.mxu0 0.0
    %2279 = vmatprep.subr.mxu0 0.0
    %2280 = vmatpush1.msra.mxu0 0.0
    %2281 = vmatprep.subr.mxu0 0.0
    %2282 = vmatpush1.msra.mxu0 0.0
    %2283 = vmatprep.subr.mxu0 0.0
    %2284 = vmatpush1.msra.mxu0 0.0
    %2285 = vmatprep.subr.mxu0 0.0
    %2286 = vmatpush1.msra.mxu0 0.0
    %2287 = vmatprep.subr.mxu0 0.0
    %2288 = vmatpush1.msra.mxu0 %v1717
    %2289 = vmatprep.subr.mxu0 0.0
    %2290 = vmatpush2.msra.mxu0 0.0
    %2291 = vmatprep.subr.mxu0 0.0
    %2292 = vmatpush2.msra.mxu0 0.0
    %2293 = vmatprep.subr.mxu0 0.0
    %2294 = vmatpush2.msra.mxu0 0.0
    %2295 = vmatprep.subr.mxu0 0.0
    %2296 = vmatpush2.msra.mxu0 0.0
    %2297 = vmatprep.subr.mxu0 0.0
    %2298 = vmatpush2.msra.mxu0 0.0
    %2299 = vmatprep.subr.mxu0 0.0
    %2300 = vmatpush2.msra.mxu0 0.0
    %2301 = vmatprep.subr.mxu0 0.0
    %2302 = vmatpush2.msra.mxu0 0.0
    %2303 = vmatprep.subr.mxu0 0.0
    %2304 = vmatpush2.msra.mxu0 0.0
    %2305 = vmatprep.subr.mxu0 0.0
    %2306 = vmatpush2.msra.mxu0 0.0
    %2307 = vmatprep.subr.mxu0 0.0
    %2308 = vmatpush2.msra.mxu0 0.0
    %2309 = vmatprep.subr.mxu0 0.0
    %2310 = vmatpush2.msra.mxu0 0.0
    %2311 = vmatprep.subr.mxu0 0.0
    %2312 = vmatpush2.msra.mxu0 0.0
    %2313 = vmatprep.subr.mxu0 0.0
    %2314 = vmatpush2.msra.mxu0 0.0
    %2315 = vmatprep.subr.mxu0 0.0
    %2316 = vmatpush2.msra.mxu0 0.0
    %2317 = vmatprep.subr.mxu0 0.0
    %2318 = vmatpush2.msra.mxu0 0.0
    %2319 = vmatprep.subr.mxu0 0.0
    %2320 = vmatpush2.msra.mxu0 0.0
    %2321 = vmatprep.mubr.f32.mxu0 0.0
    %2322 = vmatmul.mubr.f32.gmra.mxu0 %v927
    %v2323 = vpop.f32.mrf.mxu0
    %v2324 = vadd.f32 %v1765, %v2323
    %v2325 = vpop.f32.mrf.mxu0
    %2326 = vdwg.mxu0
    %2327 = vmatprep.subr.mxu0 0.0
    %2328 = vmatpush1.msra.mxu0 0.0
    %2329 = vmatprep.subr.mxu0 0.0
    %2330 = vmatpush1.msra.mxu0 0.0
    %2331 = vmatprep.subr.mxu0 0.0
    %2332 = vmatpush1.msra.mxu0 0.0
    %2333 = vmatprep.subr.mxu0 0.0
    %2334 = vmatpush1.msra.mxu0 0.0
    %2335 = vmatprep.subr.mxu0 0.0
    %2336 = vmatpush1.msra.mxu0 0.0
    %2337 = vmatprep.subr.mxu0 0.0
    %2338 = vmatpush1.msra.mxu0 0.0
    %2339 = vmatprep.subr.mxu0 0.0
    %2340 = vmatpush1.msra.mxu0 0.0
    %2341 = vmatprep.subr.mxu0 0.0
    %2342 = vmatpush1.msra.mxu0 0.0
    %2343 = vmatprep.subr.mxu0 0.0
    %2344 = vmatpush1.msra.mxu0 0.0
    %2345 = vmatprep.subr.mxu0 0.0
    %2346 = vmatpush1.msra.mxu0 0.0
    %2347 = vmatprep.subr.mxu0 0.0
    %2348 = vmatpush1.msra.mxu0 0.0
    %2349 = vmatprep.subr.mxu0 0.0
    %2350 = vmatpush1.msra.mxu0 0.0
    %2351 = vmatprep.subr.mxu0 0.0
    %2352 = vmatpush1.msra.mxu0 0.0
    %2353 = vmatprep.subr.mxu0 0.0
    %2354 = vmatpush1.msra.mxu0 0.0
    %2355 = vmatprep.subr.mxu0 0.0
    %2356 = vmatpush1.msra.mxu0 0.0
    %2357 = vmatprep.subr.mxu0 0.0
    %2358 = vmatpush1.msra.mxu0 %v1722
    %2359 = vmatprep.subr.mxu0 0.0
    %2360 = vmatpush2.msra.mxu0 0.0
    %2361 = vmatprep.subr.mxu0 0.0
    %2362 = vmatpush2.msra.mxu0 0.0
    %2363 = vmatprep.subr.mxu0 0.0
    %2364 = vmatpush2.msra.mxu0 0.0
    %2365 = vmatprep.subr.mxu0 0.0
    %2366 = vmatpush2.msra.mxu0 0.0
    %2367 = vmatprep.subr.mxu0 0.0
    %2368 = vmatpush2.msra.mxu0 0.0
    %2369 = vmatprep.subr.mxu0 0.0
    %2370 = vmatpush2.msra.mxu0 0.0
    %2371 = vmatprep.subr.mxu0 0.0
    %2372 = vmatpush2.msra.mxu0 0.0
    %2373 = vmatprep.subr.mxu0 0.0
    %2374 = vmatpush2.msra.mxu0 0.0
    %2375 = vmatprep.subr.mxu0 0.0
    %2376 = vmatpush2.msra.mxu0 0.0
    %2377 = vmatprep.subr.mxu0 0.0
    %2378 = vmatpush2.msra.mxu0 0.0
    %2379 = vmatprep.subr.mxu0 0.0
    %2380 = vmatpush2.msra.mxu0 0.0
    %2381 = vmatprep.subr.mxu0 0.0
    %2382 = vmatpush2.msra.mxu0 0.0
    %2383 = vmatprep.subr.mxu0 0.0
    %2384 = vmatpush2.msra.mxu0 0.0
    %2385 = vmatprep.subr.mxu0 0.0
    %2386 = vmatpush2.msra.mxu0 0.0
    %2387 = vmatprep.subr.mxu0 0.0
    %2388 = vmatpush2.msra.mxu0 0.0
    %2389 = vmatprep.subr.mxu0 0.0
    %2390 = vmatpush2.msra.mxu0 0.0
    %2391 = vmatprep.mubr.f32.mxu0 0.0
    %2392 = vmatmul.mubr.f32.gmra.mxu0 %v1000
    %v2393 = vpop.f32.mrf.mxu0
    %v2394 = vadd.f32 %v1765, %v2393
    %v2395 = vpop.f32.mrf.mxu0
    %2396 = vdwg.mxu0
    %2397 = vmatprep.subr.mxu0 0.0
    %2398 = vmatpush1.msra.mxu0 0.0
    %2399 = vmatprep.subr.mxu0 0.0
    %2400 = vmatpush1.msra.mxu0 0.0
    %2401 = vmatprep.subr.mxu0 0.0
    %2402 = vmatpush1.msra.mxu0 0.0
    %2403 = vmatprep.subr.mxu0 0.0
    %2404 = vmatpush1.msra.mxu0 0.0
    %2405 = vmatprep.subr.mxu0 0.0
    %2406 = vmatpush1.msra.mxu0 0.0
    %2407 = vmatprep.subr.mxu0 0.0
    %2408 = vmatpush1.msra.mxu0 0.0
    %2409 = vmatprep.subr.mxu0 0.0
    %2410 = vmatpush1.msra.mxu0 0.0
    %2411 = vmatprep.subr.mxu0 0.0
    %2412 = vmatpush1.msra.mxu0 0.0
    %2413 = vmatprep.subr.mxu0 0.0
    %2414 = vmatpush1.msra.mxu0 0.0
    %2415 = vmatprep.subr.mxu0 0.0
    %2416 = vmatpush1.msra.mxu0 0.0
    %2417 = vmatprep.subr.mxu0 0.0
    %2418 = vmatpush1.msra.mxu0 0.0
    %2419 = vmatprep.subr.mxu0 0.0
    %2420 = vmatpush1.msra.mxu0 0.0
    %2421 = vmatprep.subr.mxu0 0.0
    %2422 = vmatpush1.msra.mxu0 0.0
    %2423 = vmatprep.subr.mxu0 0.0
    %2424 = vmatpush1.msra.mxu0 0.0
    %2425 = vmatprep.subr.mxu0 0.0
    %2426 = vmatpush1.msra.mxu0 0.0
    %2427 = vmatprep.subr.mxu0 0.0
    %2428 = vmatpush1.msra.mxu0 %v1727
    %2429 = vmatprep.subr.mxu0 0.0
    %2430 = vmatpush2.msra.mxu0 0.0
    %2431 = vmatprep.subr.mxu0 0.0
    %2432 = vmatpush2.msra.mxu0 0.0
    %2433 = vmatprep.subr.mxu0 0.0
    %2434 = vmatpush2.msra.mxu0 0.0
    %2435 = vmatprep.subr.mxu0 0.0
    %2436 = vmatpush2.msra.mxu0 0.0
    %2437 = vmatprep.subr.mxu0 0.0
    %2438 = vmatpush2.msra.mxu0 0.0
    %2439 = vmatprep.subr.mxu0 0.0
    %2440 = vmatpush2.msra.mxu0 0.0
    %2441 = vmatprep.subr.mxu0 0.0
    %2442 = vmatpush2.msra.mxu0 0.0
    %2443 = vmatprep.subr.mxu0 0.0
    %2444 = vmatpush2.msra.mxu0 0.0
    %2445 = vmatprep.subr.mxu0 0.0
    %2446 = vmatpush2.msra.mxu0 0.0
    %2447 = vmatprep.subr.mxu0 0.0
    %2448 = vmatpush2.msra.mxu0 0.0
    %2449 = vmatprep.subr.mxu0 0.0
    %2450 = vmatpush2.msra.mxu0 0.0
    %2451 = vmatprep.subr.mxu0 0.0
    %2452 = vmatpush2.msra.mxu0 0.0
    %2453 = vmatprep.subr.mxu0 0.0
    %2454 = vmatpush2.msra.mxu0 0.0
    %2455 = vmatprep.subr.mxu0 0.0
    %2456 = vmatpush2.msra.mxu0 0.0
    %2457 = vmatprep.subr.mxu0 0.0
    %2458 = vmatpush2.msra.mxu0 0.0
    %2459 = vmatprep.subr.mxu0 0.0
    %2460 = vmatpush2.msra.mxu0 0.0
    %2461 = vmatprep.mubr.f32.mxu0 0.0
    %2462 = vmatmul.mubr.f32.gmra.mxu0 %v1073
    %v2463 = vpop.f32.mrf.mxu0
    %v2464 = vadd.f32 %v1765, %v2463
    %v2465 = vpop.f32.mrf.mxu0
    %2466 = vdwg.mxu0
    %2467 = vmatprep.subr.mxu0 0.0
    %2468 = vmatpush1.msra.mxu0 0.0
    %2469 = vmatprep.subr.mxu0 0.0
    %2470 = vmatpush1.msra.mxu0 0.0
    %2471 = vmatprep.subr.mxu0 0.0
    %2472 = vmatpush1.msra.mxu0 0.0
    %2473 = vmatprep.subr.mxu0 0.0
    %2474 = vmatpush1.msra.mxu0 0.0
    %2475 = vmatprep.subr.mxu0 0.0
    %2476 = vmatpush1.msra.mxu0 0.0
    %2477 = vmatprep.subr.mxu0 0.0
    %2478 = vmatpush1.msra.mxu0 0.0
    %2479 = vmatprep.subr.mxu0 0.0
    %2480 = vmatpush1.msra.mxu0 0.0
    %2481 = vmatprep.subr.mxu0 0.0
    %2482 = vmatpush1.msra.mxu0 0.0
    %2483 = vmatprep.subr.mxu0 0.0
    %2484 = vmatpush1.msra.mxu0 0.0
    %2485 = vmatprep.subr.mxu0 0.0
    %2486 = vmatpush1.msra.mxu0 0.0
    %2487 = vmatprep.subr.mxu0 0.0
    %2488 = vmatpush1.msra.mxu0 0.0
    %2489 = vmatprep.subr.mxu0 0.0
    %2490 = vmatpush1.msra.mxu0 0.0
    %2491 = vmatprep.subr.mxu0 0.0
    %2492 = vmatpush1.msra.mxu0 0.0
    %2493 = vmatprep.subr.mxu0 0.0
    %2494 = vmatpush1.msra.mxu0 0.0
    %2495 = vmatprep.subr.mxu0 0.0
    %2496 = vmatpush1.msra.mxu0 0.0
    %2497 = vmatprep.subr.mxu0 0.0
    %2498 = vmatpush1.msra.mxu0 %v1732
    %2499 = vmatprep.subr.mxu0 0.0
    %2500 = vmatpush2.msra.mxu0 0.0
    %2501 = vmatprep.subr.mxu0 0.0
    %2502 = vmatpush2.msra.mxu0 0.0
    %2503 = vmatprep.subr.mxu0 0.0
    %2504 = vmatpush2.msra.mxu0 0.0
    %2505 = vmatprep.subr.mxu0 0.0
    %2506 = vmatpush2.msra.mxu0 0.0
    %2507 = vmatprep.subr.mxu0 0.0
    %2508 = vmatpush2.msra.mxu0 0.0
    %2509 = vmatprep.subr.mxu0 0.0
    %2510 = vmatpush2.msra.mxu0 0.0
    %2511 = vmatprep.subr.mxu0 0.0
    %2512 = vmatpush2.msra.mxu0 0.0
    %2513 = vmatprep.subr.mxu0 0.0
    %2514 = vmatpush2.msra.mxu0 0.0
    %2515 = vmatprep.subr.mxu0 0.0
    %2516 = vmatpush2.msra.mxu0 0.0
    %2517 = vmatprep.subr.mxu0 0.0
    %2518 = vmatpush2.msra.mxu0 0.0
    %2519 = vmatprep.subr.mxu0 0.0
    %2520 = vmatpush2.msra.mxu0 0.0
    %2521 = vmatprep.subr.mxu0 0.0
    %2522 = vmatpush2.msra.mxu0 0.0
    %2523 = vmatprep.subr.mxu0 0.0
    %2524 = vmatpush2.msra.mxu0 0.0
    %2525 = vmatprep.subr.mxu0 0.0
    %2526 = vmatpush2.msra.mxu0 0.0
    %2527 = vmatprep.subr.mxu0 0.0
    %2528 = vmatpush2.msra.mxu0 0.0
    %2529 = vmatprep.subr.mxu0 0.0
    %2530 = vmatpush2.msra.mxu0 0.0
    %2531 = vmatprep.mubr.f32.mxu0 0.0
    %2532 = vmatmul.mubr.f32.gmra.mxu0 %v1146
    %v2533 = vpop.f32.mrf.mxu0
    %v2534 = vadd.f32 %v1765, %v2533
    %v2535 = vpop.f32.mrf.mxu0
    %2536 = vdwg.mxu0
    %2537 = vmatprep.subr.mxu0 0.0
    %2538 = vmatpush1.msra.mxu0 0.0
    %2539 = vmatprep.subr.mxu0 0.0
    %2540 = vmatpush1.msra.mxu0 0.0
    %2541 = vmatprep.subr.mxu0 0.0
    %2542 = vmatpush1.msra.mxu0 0.0
    %2543 = vmatprep.subr.mxu0 0.0
    %2544 = vmatpush1.msra.mxu0 0.0
    %2545 = vmatprep.subr.mxu0 0.0
    %2546 = vmatpush1.msra.mxu0 0.0
    %2547 = vmatprep.subr.mxu0 0.0
    %2548 = vmatpush1.msra.mxu0 0.0
    %2549 = vmatprep.subr.mxu0 0.0
    %2550 = vmatpush1.msra.mxu0 0.0
    %2551 = vmatprep.subr.mxu0 0.0
    %2552 = vmatpush1.msra.mxu0 0.0
    %2553 = vmatprep.subr.mxu0 0.0
    %2554 = vmatpush1.msra.mxu0 0.0
    %2555 = vmatprep.subr.mxu0 0.0
    %2556 = vmatpush1.msra.mxu0 0.0
    %2557 = vmatprep.subr.mxu0 0.0
    %2558 = vmatpush1.msra.mxu0 0.0
    %2559 = vmatprep.subr.mxu0 0.0
    %2560 = vmatpush1.msra.mxu0 0.0
    %2561 = vmatprep.subr.mxu0 0.0
    %2562 = vmatpush1.msra.mxu0 0.0
    %2563 = vmatprep.subr.mxu0 0.0
    %2564 = vmatpush1.msra.mxu0 0.0
    %2565 = vmatprep.subr.mxu0 0.0
    %2566 = vmatpush1.msra.mxu0 0.0
    %2567 = vmatprep.subr.mxu0 0.0
    %2568 = vmatpush1.msra.mxu0 %v1737
    %2569 = vmatprep.subr.mxu0 0.0
    %2570 = vmatpush2.msra.mxu0 0.0
    %2571 = vmatprep.subr.mxu0 0.0
    %2572 = vmatpush2.msra.mxu0 0.0
    %2573 = vmatprep.subr.mxu0 0.0
    %2574 = vmatpush2.msra.mxu0 0.0
    %2575 = vmatprep.subr.mxu0 0.0
    %2576 = vmatpush2.msra.mxu0 0.0
    %2577 = vmatprep.subr.mxu0 0.0
    %2578 = vmatpush2.msra.mxu0 0.0
    %2579 = vmatprep.subr.mxu0 0.0
    %2580 = vmatpush2.msra.mxu0 0.0
    %2581 = vmatprep.subr.mxu0 0.0
    %2582 = vmatpush2.msra.mxu0 0.0
    %2583 = vmatprep.subr.mxu0 0.0
    %2584 = vmatpush2.msra.mxu0 0.0
    %2585 = vmatprep.subr.mxu0 0.0
    %2586 = vmatpush2.msra.mxu0 0.0
    %2587 = vmatprep.subr.mxu0 0.0
    %2588 = vmatpush2.msra.mxu0 0.0
    %2589 = vmatprep.subr.mxu0 0.0
    %2590 = vmatpush2.msra.mxu0 0.0
    %2591 = vmatprep.subr.mxu0 0.0
    %2592 = vmatpush2.msra.mxu0 0.0
    %2593 = vmatprep.subr.mxu0 0.0
    %2594 = vmatpush2.msra.mxu0 0.0
    %2595 = vmatprep.subr.mxu0 0.0
    %2596 = vmatpush2.msra.mxu0 0.0
    %2597 = vmatprep.subr.mxu0 0.0
    %2598 = vmatpush2.msra.mxu0 0.0
    %2599 = vmatprep.subr.mxu0 0.0
    %2600 = vmatpush2.msra.mxu0 0.0
    %2601 = vmatprep.mubr.f32.mxu0 0.0
    %2602 = vmatmul.mubr.f32.gmra.mxu0 %v1219
    %v2603 = vpop.f32.mrf.mxu0
    %v2604 = vadd.f32 %v1765, %v2603
    %v2605 = vpop.f32.mrf.mxu0
    %2606 = vdwg.mxu0
    %2607 = vmatprep.subr.mxu0 0.0
    %2608 = vmatpush1.msra.mxu0 0.0
    %2609 = vmatprep.subr.mxu0 0.0
    %2610 = vmatpush1.msra.mxu0 0.0
    %2611 = vmatprep.subr.mxu0 0.0
    %2612 = vmatpush1.msra.mxu0 0.0
    %2613 = vmatprep.subr.mxu0 0.0
    %2614 = vmatpush1.msra.mxu0 0.0
    %2615 = vmatprep.subr.mxu0 0.0
    %2616 = vmatpush1.msra.mxu0 0.0
    %2617 = vmatprep.subr.mxu0 0.0
    %2618 = vmatpush1.msra.mxu0 0.0
    %2619 = vmatprep.subr.mxu0 0.0
    %2620 = vmatpush1.msra.mxu0 0.0
    %2621 = vmatprep.subr.mxu0 0.0
    %2622 = vmatpush1.msra.mxu0 0.0
    %2623 = vmatprep.subr.mxu0 0.0
    %2624 = vmatpush1.msra.mxu0 0.0
    %2625 = vmatprep.subr.mxu0 0.0
    %2626 = vmatpush1.msra.mxu0 0.0
    %2627 = vmatprep.subr.mxu0 0.0
    %2628 = vmatpush1.msra.mxu0 0.0
    %2629 = vmatprep.subr.mxu0 0.0
    %2630 = vmatpush1.msra.mxu0 0.0
    %2631 = vmatprep.subr.mxu0 0.0
    %2632 = vmatpush1.msra.mxu0 0.0
    %2633 = vmatprep.subr.mxu0 0.0
    %2634 = vmatpush1.msra.mxu0 0.0
    %2635 = vmatprep.subr.mxu0 0.0
    %2636 = vmatpush1.msra.mxu0 0.0
    %2637 = vmatprep.subr.mxu0 0.0
    %2638 = vmatpush1.msra.mxu0 %v1742
    %2639 = vmatprep.subr.mxu0 0.0
    %2640 = vmatpush2.msra.mxu0 0.0
    %2641 = vmatprep.subr.mxu0 0.0
    %2642 = vmatpush2.msra.mxu0 0.0
    %2643 = vmatprep.subr.mxu0 0.0
    %2644 = vmatpush2.msra.mxu0 0.0
    %2645 = vmatprep.subr.mxu0 0.0
    %2646 = vmatpush2.msra.mxu0 0.0
    %2647 = vmatprep.subr.mxu0 0.0
    %2648 = vmatpush2.msra.mxu0 0.0
    %2649 = vmatprep.subr.mxu0 0.0
    %2650 = vmatpush2.msra.mxu0 0.0
    %2651 = vmatprep.subr.mxu0 0.0
    %2652 = vmatpush2.msra.mxu0 0.0
    %2653 = vmatprep.subr.mxu0 0.0
    %2654 = vmatpush2.msra.mxu0 0.0
    %2655 = vmatprep.subr.mxu0 0.0
    %2656 = vmatpush2.msra.mxu0 0.0
    %2657 = vmatprep.subr.mxu0 0.0
    %2658 = vmatpush2.msra.mxu0 0.0
    %2659 = vmatprep.subr.mxu0 0.0
    %2660 = vmatpush2.msra.mxu0 0.0
    %2661 = vmatprep.subr.mxu0 0.0
    %2662 = vmatpush2.msra.mxu0 0.0
    %2663 = vmatprep.subr.mxu0 0.0
    %2664 = vmatpush2.msra.mxu0 0.0
    %2665 = vmatprep.subr.mxu0 0.0
    %2666 = vmatpush2.msra.mxu0 0.0
    %2667 = vmatprep.subr.mxu0 0.0
    %2668 = vmatpush2.msra.mxu0 0.0
    %2669 = vmatprep.subr.mxu0 0.0
    %2670 = vmatpush2.msra.mxu0 0.0
    %2671 = vmatprep.mubr.f32.mxu0 0.0
    %2672 = vmatmul.mubr.f32.gmra.mxu0 %v1292
    %v2673 = vpop.f32.mrf.mxu0
    %v2674 = vadd.f32 %v1765, %v2673
    %v2675 = vpop.f32.mrf.mxu0
    %2676 = vdwg.mxu0
    %2677 = vmatprep.subr.mxu0 0.0
    %2678 = vmatpush1.msra.mxu0 0.0
    %2679 = vmatprep.subr.mxu0 0.0
    %2680 = vmatpush1.msra.mxu0 0.0
    %2681 = vmatprep.subr.mxu0 0.0
    %2682 = vmatpush1.msra.mxu0 0.0
    %2683 = vmatprep.subr.mxu0 0.0
    %2684 = vmatpush1.msra.mxu0 0.0
    %2685 = vmatprep.subr.mxu0 0.0
    %2686 = vmatpush1.msra.mxu0 0.0
    %2687 = vmatprep.subr.mxu0 0.0
    %2688 = vmatpush1.msra.mxu0 0.0
    %2689 = vmatprep.subr.mxu0 0.0
    %2690 = vmatpush1.msra.mxu0 0.0
    %2691 = vmatprep.subr.mxu0 0.0
    %2692 = vmatpush1.msra.mxu0 0.0
    %2693 = vmatprep.subr.mxu0 0.0
    %2694 = vmatpush1.msra.mxu0 0.0
    %2695 = vmatprep.subr.mxu0 0.0
    %2696 = vmatpush1.msra.mxu0 0.0
    %2697 = vmatprep.subr.mxu0 0.0
    %2698 = vmatpush1.msra.mxu0 0.0
    %2699 = vmatprep.subr.mxu0 0.0
    %2700 = vmatpush1.msra.mxu0 0.0
    %2701 = vmatprep.subr.mxu0 0.0
    %2702 = vmatpush1.msra.mxu0 0.0
    %2703 = vmatprep.subr.mxu0 0.0
    %2704 = vmatpush1.msra.mxu0 0.0
    %2705 = vmatprep.subr.mxu0 0.0
    %2706 = vmatpush1.msra.mxu0 0.0
    %2707 = vmatprep.subr.mxu0 0.0
    %2708 = vmatpush1.msra.mxu0 %v1747
    %2709 = vmatprep.subr.mxu0 0.0
    %2710 = vmatpush2.msra.mxu0 0.0
    %2711 = vmatprep.subr.mxu0 0.0
    %2712 = vmatpush2.msra.mxu0 0.0
    %2713 = vmatprep.subr.mxu0 0.0
    %2714 = vmatpush2.msra.mxu0 0.0
    %2715 = vmatprep.subr.mxu0 0.0
    %2716 = vmatpush2.msra.mxu0 0.0
    %2717 = vmatprep.subr.mxu0 0.0
    %2718 = vmatpush2.msra.mxu0 0.0
    %2719 = vmatprep.subr.mxu0 0.0
    %2720 = vmatpush2.msra.mxu0 0.0
    %2721 = vmatprep.subr.mxu0 0.0
    %2722 = vmatpush2.msra.mxu0 0.0
    %2723 = vmatprep.subr.mxu0 0.0
    %2724 = vmatpush2.msra.mxu0 0.0
    %2725 = vmatprep.subr.mxu0 0.0
    %2726 = vmatpush2.msra.mxu0 0.0
    %2727 = vmatprep.subr.mxu0 0.0
    %2728 = vmatpush2.msra.mxu0 0.0
    %2729 = vmatprep.subr.mxu0 0.0
    %2730 = vmatpush2.msra.mxu0 0.0
    %2731 = vmatprep.subr.mxu0 0.0
    %2732 = vmatpush2.msra.mxu0 0.0
    %2733 = vmatprep.subr.mxu0 0.0
    %2734 = vmatpush2.msra.mxu0 0.0
    %2735 = vmatprep.subr.mxu0 0.0
    %2736 = vmatpush2.msra.mxu0 0.0
    %2737 = vmatprep.subr.mxu0 0.0
    %2738 = vmatpush2.msra.mxu0 0.0
    %2739 = vmatprep.subr.mxu0 0.0
    %2740 = vmatpush2.msra.mxu0 0.0
    %2741 = vmatprep.mubr.f32.mxu0 0.0
    %2742 = vmatmul.mubr.f32.gmra.mxu0 %v1365
    %v2743 = vpop.f32.mrf.mxu0
    %v2744 = vadd.f32 %v1765, %v2743
    %v2745 = vpop.f32.mrf.mxu0
    %2746 = vdwg.mxu0
    %2747 = vmatprep.subr.mxu0 0.0
    %2748 = vmatpush1.msra.mxu0 0.0
    %2749 = vmatprep.subr.mxu0 0.0
    %2750 = vmatpush1.msra.mxu0 0.0
    %2751 = vmatprep.subr.mxu0 0.0
    %2752 = vmatpush1.msra.mxu0 0.0
    %2753 = vmatprep.subr.mxu0 0.0
    %2754 = vmatpush1.msra.mxu0 0.0
    %2755 = vmatprep.subr.mxu0 0.0
    %2756 = vmatpush1.msra.mxu0 0.0
    %2757 = vmatprep.subr.mxu0 0.0
    %2758 = vmatpush1.msra.mxu0 0.0
    %2759 = vmatprep.subr.mxu0 0.0
    %2760 = vmatpush1.msra.mxu0 0.0
    %2761 = vmatprep.subr.mxu0 0.0
    %2762 = vmatpush1.msra.mxu0 0.0
    %2763 = vmatprep.subr.mxu0 0.0
    %2764 = vmatpush1.msra.mxu0 0.0
    %2765 = vmatprep.subr.mxu0 0.0
    %2766 = vmatpush1.msra.mxu0 0.0
    %2767 = vmatprep.subr.mxu0 0.0
    %2768 = vmatpush1.msra.mxu0 0.0
    %2769 = vmatprep.subr.mxu0 0.0
    %2770 = vmatpush1.msra.mxu0 0.0
    %2771 = vmatprep.subr.mxu0 0.0
    %2772 = vmatpush1.msra.mxu0 0.0
    %2773 = vmatprep.subr.mxu0 0.0
    %2774 = vmatpush1.msra.mxu0 0.0
    %2775 = vmatprep.subr.mxu0 0.0
    %2776 = vmatpush1.msra.mxu0 0.0
    %2777 = vmatprep.subr.mxu0 0.0
    %2778 = vmatpush1.msra.mxu0 %v1752
    %2779 = vmatprep.subr.mxu0 0.0
    %2780 = vmatpush2.msra.mxu0 0.0
    %2781 = vmatprep.subr.mxu0 0.0
    %2782 = vmatpush2.msra.mxu0 0.0
    %2783 = vmatprep.subr.mxu0 0.0
    %2784 = vmatpush2.msra.mxu0 0.0
    %2785 = vmatprep.subr.mxu0 0.0
    %2786 = vmatpush2.msra.mxu0 0.0
    %2787 = vmatprep.subr.mxu0 0.0
    %2788 = vmatpush2.msra.mxu0 0.0
    %2789 = vmatprep.subr.mxu0 0.0
    %2790 = vmatpush2.msra.mxu0 0.0
    %2791 = vmatprep.subr.mxu0 0.0
    %2792 = vmatpush2.msra.mxu0 0.0
    %2793 = vmatprep.subr.mxu0 0.0
    %2794 = vmatpush2.msra.mxu0 0.0
    %2795 = vmatprep.subr.mxu0 0.0
    %2796 = vmatpush2.msra.mxu0 0.0
    %2797 = vmatprep.subr.mxu0 0.0
    %2798 = vmatpush2.msra.mxu0 0.0
    %2799 = vmatprep.subr.mxu0 0.0
    %2800 = vmatpush2.msra.mxu0 0.0
    %2801 = vmatprep.subr.mxu0 0.0
    %2802 = vmatpush2.msra.mxu0 0.0
    %2803 = vmatprep.subr.mxu0 0.0
    %2804 = vmatpush2.msra.mxu0 0.0
    %2805 = vmatprep.subr.mxu0 0.0
    %2806 = vmatpush2.msra.mxu0 0.0
    %2807 = vmatprep.subr.mxu0 0.0
    %2808 = vmatpush2.msra.mxu0 0.0
    %2809 = vmatprep.subr.mxu0 0.0
    %2810 = vmatpush2.msra.mxu0 0.0
    %2811 = vmatprep.mubr.f32.mxu0 0.0
    %2812 = vmatmul.mubr.f32.gmra.mxu0 %v1438
    %v2813 = vpop.f32.mrf.mxu0
    %v2814 = vadd.f32 %v1765, %v2813
    %v2815 = vpop.f32.mrf.mxu0
    %2816 = vdwg.mxu0
    %2817 = vmatprep.subr.mxu0 0.0
    %2818 = vmatpush1.msra.mxu0 0.0
    %2819 = vmatprep.subr.mxu0 0.0
    %2820 = vmatpush1.msra.mxu0 0.0
    %2821 = vmatprep.subr.mxu0 0.0
    %2822 = vmatpush1.msra.mxu0 0.0
    %2823 = vmatprep.subr.mxu0 0.0
    %2824 = vmatpush1.msra.mxu0 0.0
    %2825 = vmatprep.subr.mxu0 0.0
    %2826 = vmatpush1.msra.mxu0 0.0
    %2827 = vmatprep.subr.mxu0 0.0
    %2828 = vmatpush1.msra.mxu0 0.0
    %2829 = vmatprep.subr.mxu0 0.0
    %2830 = vmatpush1.msra.mxu0 0.0
    %2831 = vmatprep.subr.mxu0 0.0
    %2832 = vmatpush1.msra.mxu0 0.0
    %2833 = vmatprep.subr.mxu0 0.0
    %2834 = vmatpush1.msra.mxu0 0.0
    %2835 = vmatprep.subr.mxu0 0.0
    %2836 = vmatpush1.msra.mxu0 0.0
    %2837 = vmatprep.subr.mxu0 0.0
    %2838 = vmatpush1.msra.mxu0 0.0
    %2839 = vmatprep.subr.mxu0 0.0
    %2840 = vmatpush1.msra.mxu0 0.0
    %2841 = vmatprep.subr.mxu0 0.0
    %2842 = vmatpush1.msra.mxu0 0.0
    %2843 = vmatprep.subr.mxu0 0.0
    %2844 = vmatpush1.msra.mxu0 0.0
    %2845 = vmatprep.subr.mxu0 0.0
    %2846 = vmatpush1.msra.mxu0 0.0
    %2847 = vmatprep.subr.mxu0 0.0
    %2848 = vmatpush1.msra.mxu0 %v1757
    %2849 = vmatprep.subr.mxu0 0.0
    %2850 = vmatpush2.msra.mxu0 0.0
    %2851 = vmatprep.subr.mxu0 0.0
    %2852 = vmatpush2.msra.mxu0 0.0
    %2853 = vmatprep.subr.mxu0 0.0
    %2854 = vmatpush2.msra.mxu0 0.0
    %2855 = vmatprep.subr.mxu0 0.0
    %2856 = vmatpush2.msra.mxu0 0.0
    %2857 = vmatprep.subr.mxu0 0.0
    %2858 = vmatpush2.msra.mxu0 0.0
    %2859 = vmatprep.subr.mxu0 0.0
    %2860 = vmatpush2.msra.mxu0 0.0
    %2861 = vmatprep.subr.mxu0 0.0
    %2862 = vmatpush2.msra.mxu0 0.0
    %2863 = vmatprep.subr.mxu0 0.0
    %2864 = vmatpush2.msra.mxu0 0.0
    %2865 = vmatprep.subr.mxu0 0.0
    %2866 = vmatpush2.msra.mxu0 0.0
    %2867 = vmatprep.subr.mxu0 0.0
    %2868 = vmatpush2.msra.mxu0 0.0
    %2869 = vmatprep.subr.mxu0 0.0
    %2870 = vmatpush2.msra.mxu0 0.0
    %2871 = vmatprep.subr.mxu0 0.0
    %2872 = vmatpush2.msra.mxu0 0.0
    %2873 = vmatprep.subr.mxu0 0.0
    %2874 = vmatpush2.msra.mxu0 0.0
    %2875 = vmatprep.subr.mxu0 0.0
    %2876 = vmatpush2.msra.mxu0 0.0
    %2877 = vmatprep.subr.mxu0 0.0
    %2878 = vmatpush2.msra.mxu0 0.0
    %2879 = vmatprep.subr.mxu0 0.0
    %2880 = vmatpush2.msra.mxu0 0.0
    %2881 = vmatprep.mubr.f32.mxu0 0.0
    %2882 = vmatmul.mubr.f32.gmra.mxu0 %v1511
    %v2883 = vpop.f32.mrf.mxu0
    %v2884 = vadd.f32 %v1765, %v2883
    %v2885 = vpop.f32.mrf.mxu0
    %2886 = vdwg.mxu0
    %v2887 = vtanh.pop %v1834
    %v2888 = vtanh.pop %v1904
    %v2889 = vtanh.pop %v1974
    %v2890 = vtanh.pop %v2044
    %v2891 = vtanh.pop %v2114
    %v2892 = vtanh.pop %v2184
    %v2893 = vtanh.pop %v2254
    %v2894 = vtanh.pop %v2324
    %v2895 = vtanh.pop %v2394
    %v2896 = vtanh.pop %v2464
    %v2897 = vtanh.pop %v2534
    %v2898 = vtanh.pop %v2604
    %v2899 = vtanh.pop %v2674
    %v2900 = vtanh.pop %v2744
    %v2901 = vtanh.pop %v2814
    %v2902 = vtanh.pop %v2884
    %v2903 = vrot.slane %v2887, 4
    %v2904 = vadd.f32 %v2887, %v2903
    %v2905 = vrot.slane %v2904, 2
    %v2906 = vadd.f32 %v2904, %v2905
    %v2907 = vrot.slane %v2906, 1
    %v2908 = vadd.f32 %v2906, %v2907
    %v2909 = vrot.slane %v2888, 4
    %v2910 = vadd.f32 %v2888, %v2909
    %v2911 = vrot.slane %v2910, 2
    %v2912 = vadd.f32 %v2910, %v2911
    %v2913 = vrot.slane %v2912, 1
    %v2914 = vadd.f32 %v2912, %v2913
    %v2915 = vrot.slane %v2889, 4
    %v2916 = vadd.f32 %v2889, %v2915
    %v2917 = vrot.slane %v2916, 2
    %v2918 = vadd.f32 %v2916, %v2917
    %v2919 = vrot.slane %v2918, 1
    %v2920 = vadd.f32 %v2918, %v2919
    %v2921 = vrot.slane %v2890, 4
    %v2922 = vadd.f32 %v2890, %v2921
    %v2923 = vrot.slane %v2922, 2
    %v2924 = vadd.f32 %v2922, %v2923
    %v2925 = vrot.slane %v2924, 1
    %v2926 = vadd.f32 %v2924, %v2925
    %v2927 = vrot.slane %v2891, 4
    %v2928 = vadd.f32 %v2891, %v2927
    %v2929 = vrot.slane %v2928, 2
    %v2930 = vadd.f32 %v2928, %v2929
    %v2931 = vrot.slane %v2930, 1
    %v2932 = vadd.f32 %v2930, %v2931
    %v2933 = vrot.slane %v2892, 4
    %v2934 = vadd.f32 %v2892, %v2933
    %v2935 = vrot.slane %v2934, 2
    %v2936 = vadd.f32 %v2934, %v2935
    %v2937 = vrot.slane %v2936, 1
    %v2938 = vadd.f32 %v2936, %v2937
    %v2939 = vrot.slane %v2893, 4
    %v2940 = vadd.f32 %v2893, %v2939
    %v2941 = vrot.slane %v2940, 2
    %v2942 = vadd.f32 %v2940, %v2941
    %v2943 = vrot.slane %v2942, 1
    %v2944 = vadd.f32 %v2942, %v2943
    %v2945 = vrot.slane %v2894, 4
    %v2946 = vadd.f32 %v2894, %v2945
    %v2947 = vrot.slane %v2946, 2
    %v2948 = vadd.f32 %v2946, %v2947
    %v2949 = vrot.slane %v2948, 1
    %v2950 = vadd.f32 %v2948, %v2949
    %v2951 = vrot.slane %v2895, 4
    %v2952 = vadd.f32 %v2895, %v2951
    %v2953 = vrot.slane %v2952, 2
    %v2954 = vadd.f32 %v2952, %v2953
    %v2955 = vrot.slane %v2954, 1
    %v2956 = vadd.f32 %v2954, %v2955
    %v2957 = vrot.slane %v2896, 4
    %v2958 = vadd.f32 %v2896, %v2957
    %v2959 = vrot.slane %v2958, 2
    %v2960 = vadd.f32 %v2958, %v2959
    %v2961 = vrot.slane %v2960, 1
    %v2962 = vadd.f32 %v2960, %v2961
    %v2963 = vrot.slane %v2897, 4
    %v2964 = vadd.f32 %v2897, %v2963
    %v2965 = vrot.slane %v2964, 2
    %v2966 = vadd.f32 %v2964, %v2965
    %v2967 = vrot.slane %v2966, 1
    %v2968 = vadd.f32 %v2966, %v2967
    %v2969 = vrot.slane %v2898, 4
    %v2970 = vadd.f32 %v2898, %v2969
    %v2971 = vrot.slane %v2970, 2
    %v2972 = vadd.f32 %v2970, %v2971
    %v2973 = vrot.slane %v2972, 1
    %v2974 = vadd.f32 %v2972, %v2973
    %v2975 = vrot.slane %v2899, 4
    %v2976 = vadd.f32 %v2899, %v2975
    %v2977 = vrot.slane %v2976, 2
    %v2978 = vadd.f32 %v2976, %v2977
    %v2979 = vrot.slane %v2978, 1
    %v2980 = vadd.f32 %v2978, %v2979
    %v2981 = vrot.slane %v2900, 4
    %v2982 = vadd.f32 %v2900, %v2981
    %v2983 = vrot.slane %v2982, 2
    %v2984 = vadd.f32 %v2982, %v2983
    %v2985 = vrot.slane %v2984, 1
    %v2986 = vadd.f32 %v2984, %v2985
    %v2987 = vrot.slane %v2901, 4
    %v2988 = vadd.f32 %v2901, %v2987
    %v2989 = vrot.slane %v2988, 2
    %v2990 = vadd.f32 %v2988, %v2989
    %v2991 = vrot.slane %v2990, 1
    %v2992 = vadd.f32 %v2990, %v2991
    %v2993 = vrot.slane %v2902, 4
    %v2994 = vadd.f32 %v2902, %v2993
    %v2995 = vrot.slane %v2994, 2
    %v2996 = vadd.f32 %v2994, %v2995
    %v2997 = vrot.slane %v2996, 1
    %v2998 = vadd.f32 %v2996, %v2997
    %vm3015 = vcmask 1041409
    %v3016 = vsel %vm3015, %v2914, %v2908
    %vm3017 = vcmask 1042434
    %v3018 = vsel %vm3017, %v2920, %v3016
    %vm3019 = vcmask 1043459
    %v3020 = vsel %vm3019, %v2926, %v3018
    %vm3021 = vcmask 1044484
    %v3022 = vsel %vm3021, %v2932, %v3020
    %vm3023 = vcmask 1045509
    %v3024 = vsel %vm3023, %v2938, %v3022
    %vm3025 = vcmask 1046534
    %v3026 = vsel %vm3025, %v2944, %v3024
    %vm3027 = vcmask 1047559
    %v3028 = vsel %vm3027, %v2950, %v3026
    %v3029 = vsel %vm3015, %v2962, %v2956
    %v3030 = vsel %vm3017, %v2968, %v3029
    %v3031 = vsel %vm3019, %v2974, %v3030
    %v3032 = vsel %vm3021, %v2980, %v3031
    %v3033 = vsel %vm3023, %v2986, %v3032
    %v3034 = vsel %vm3025, %v2992, %v3033
    %v3035 = vsel %vm3027, %v2998, %v3034
    %3038 = vst [vmem:[#allocation2] sm:$0xff] %v3028
    %3039 = vst [vmem:[#allocation2 + $0x8] sm:$0xff] %v3035
    // Predicated region
    $region34: #{sequential_forward.1} parent=1 // pred_check
      _
    $region35: #{sequential_forward.1} parent=1 // pred_check_branch
      %3041 = sbr.rel (0) target = $region37
    $region36: #{sequential_forward.1} parent=1 // pred_region
      %s3043 = ssub.s32 256, 256
      %3044 = vsyncadd [#allocation3], %s3043
      %s3045 = sshll.u32 [#allocation2], 4
      %s3046 = int_to_ptr.vmem [resolvable:$true] %s3045
      %3051 = dma.vmem_to_hbm [thread:$0]  %s3046, 256, %s8, [#allocation3], 128, 128, 8
    $region37: #{sequential_forward.1} parent=1 // pred_fallthru
      _
    // Predicated region
    $region38: #{sequential_forward.1} parent=1 // pred_check
      _
    $region39: #{sequential_forward.1} parent=1 // pred_check_branch
      %3053 = sbr.rel (0) target = $region41
    $region40: #{sequential_forward.1} parent=1 // pred_region
      %3054 = dma.done [#allocation3], 256
    $region41: #{sequential_forward.1} parent=1 // pred_fallthru
      _
    %3055 = vsyncpa [#allocation3], 1

</llo_original>
